<compile_context>
chip_gen: v7x
topology: tpu7x:2x2x1
jax: 0.10.0
libtpu: 0.0.40
codegen_flags: <defaults>
</compile_context>

<pallas_src>
import jax
import jax.numpy as jnp
from jax.experimental import pallas as pl
from jax.experimental.pallas import tpu as pltpu

EPS = 1e-5  # PyTorch BatchNorm1d default eps
D_IN, D_HID, D_OUT = 512, 512, 256


def edge_kernel(x_ref, w0_ref, g0_ref, be0_ref, w1_hbm_ref, g1_ref, be1_ref,
                out_ref, w1_vmem, w1_sem):
    # Kick off the W1 HBM->VMEM DMA immediately; it overlaps fc0 + BN0 + ReLU.
    w1_copy = pltpu.make_async_copy(w1_hbm_ref, w1_vmem, w1_sem)
    w1_copy.start()

    # --- fc0 (bias omitted: exactly cancelled by batch-stats BN below) ------
    # x arrives as bf16; MXU runs bf16 x bf16 with f32 accumulation.
    h = jnp.dot(x_ref[...], w0_ref[...],
                preferred_element_type=jnp.float32)               # (B, 512) f32

    # --- BatchNorm1d(512): one-pass stats, folded scale/shift ---------------
    inv_b = 1.0 / h.shape[0]
    mean0 = jnp.sum(h, axis=0, keepdims=True) * inv_b             # (1, 512)
    ex2_0 = jnp.sum(h * h, axis=0, keepdims=True) * inv_b
    var0 = jnp.maximum(ex2_0 - mean0 * mean0, 0.0)                # clamp: no NaN
    scale0 = g0_ref[...] * jax.lax.rsqrt(var0 + EPS)
    shift0 = be0_ref[...] - mean0 * scale0

    # --- affine + ReLU fused -------------------------------------------------
    h = jnp.maximum(h * scale0 + shift0, 0.0)

    # --- fc1 (W1 arrives via the overlapped DMA) -----------------------------
    w1_copy.wait()
    y = jnp.dot(h.astype(jnp.bfloat16), w1_vmem[...],
                preferred_element_type=jnp.float32)               # (B, 256) f32

    # --- BatchNorm1d(256) -----------------------------------------------------
    mean1 = jnp.sum(y, axis=0, keepdims=True) * inv_b
    ex2_1 = jnp.sum(y * y, axis=0, keepdims=True) * inv_b
    var1 = jnp.maximum(ex2_1 - mean1 * mean1, 0.0)                # clamp: no NaN
    scale1 = g1_ref[...] * jax.lax.rsqrt(var1 + EPS)
    shift1 = be1_ref[...] - mean1 * scale1
    out_ref[...] = (y * scale1 + shift1).astype(out_ref.dtype)


def edge_module_forward(x_bf16, w0_bf16, g0, be0, w1_bf16, g1, be1,
                        out_dtype=jnp.float32):
    """x_bf16: (B, 512) bf16.  w0: (512, 512) bf16 [in,out], w1: (512,256) bf16.

    Set out_dtype=jnp.bfloat16 to halve output writeback if the consumer
    tolerates bf16.
    """
    B = x_bf16.shape[0]
    out_bytes = B * D_OUT * jnp.dtype(out_dtype).itemsize
    flops = 2 * B * D_IN * D_HID + 2 * B * D_HID * D_OUT
    bytes_accessed = (w0_bf16.size * 2 + w1_bf16.size * 2     # bf16 weights
                      + x_bf16.size * 2 + out_bytes           # bf16 x, output
                      + (g0.size + be0.size + g1.size + be1.size) * 4)
    vmem = pl.BlockSpec(memory_space=pltpu.MemorySpace.VMEM)
    return pl.pallas_call(
        edge_kernel,
        out_shape=jax.ShapeDtypeStruct((B, D_OUT), out_dtype),
        in_specs=[vmem,                                   # x (bf16)
                  vmem,                                   # w0
                  vmem, vmem,                             # gamma0, beta0
                  pl.BlockSpec(memory_space=pl.ANY),      # w1 stays in HBM
                  vmem, vmem],                            # gamma1, beta1
        out_specs=vmem,
        scratch_shapes=[pltpu.VMEM((D_HID, D_OUT), jnp.bfloat16),
                        pltpu.SemaphoreType.DMA],
        compiler_params=pltpu.CompilerParams(
            vmem_limit_bytes=32 * 1024 * 1024),
        cost_estimate=pl.CostEstimate(flops=flops, transcendentals=0,
                                      bytes_accessed=bytes_accessed),
    )(x_bf16, w0_bf16, g0, be0, w1_bf16, g1, be1)


# ---------------------------------------------------------------------------
# References for correctness checks.
# ---------------------------------------------------------------------------
def reference_forward_f32(x, w0, b0, g0, be0, w1, b1, g1, be1):
    """Faithful f32 PyTorch-semantics forward (with biases, two-pass var)."""
    h = x @ w0 + b0
    m = h.mean(0, keepdims=True)
    v = ((h - m) ** 2).mean(0, keepdims=True)
    h = jnp.maximum((h - m) / jnp.sqrt(v + EPS) * g0 + be0, 0.0)
    y = h @ w1 + b1
    m1 = y.mean(0, keepdims=True)
    v1 = ((y - m1) ** 2).mean(0, keepdims=True)
    return (y - m1) / jnp.sqrt(v1 + EPS) * g1 + be1


def reference_forward_matched(x_bf16, w0_bf16, g0, be0, w1_bf16, g1, be1):
    """Same arithmetic as the kernel (bf16 matmuls, one-pass stats, no bias)."""
    h = jnp.dot(x_bf16, w0_bf16, preferred_element_type=jnp.float32)
    m = h.mean(0, keepdims=True)
    v = jnp.maximum((h * h).mean(0, keepdims=True) - m * m, 0.0)
    s = g0 * jax.lax.rsqrt(v + EPS)
    h = jnp.maximum(h * s + (be0 - m * s), 0.0)
    y = jnp.dot(h.astype(jnp.bfloat16), w1_bf16,
                preferred_element_type=jnp.float32)
    m1 = y.mean(0, keepdims=True)
    v1 = jnp.maximum((y * y).mean(0, keepdims=True) - m1 * m1, 0.0)
    s1 = g1 * jax.lax.rsqrt(v1 + EPS)
    return y * s1 + (be1 - m1 * s1)


if __name__ == "__main__":
    key = jax.random.PRNGKey(0)
    kx, kw0, kb0, kw1, kb1, kg0, kbe0, kg1, kbe1 = jax.random.split(key, 9)

    B = 64  # small batch for the test; feature dims are fixed by the module

    x = jax.random.normal(kx, (B, D_IN), dtype=jnp.float32)

    # Linear params (PyTorch-style init), stored [in, out].
    s0 = 1.0 / jnp.sqrt(jnp.float32(D_IN))
    s1 = 1.0 / jnp.sqrt(jnp.float32(D_HID))
    w0 = jax.random.uniform(kw0, (D_IN, D_HID), jnp.float32, -s0, s0)
    b0 = jax.random.uniform(kb0, (1, D_HID), jnp.float32, -s0, s0)
    w1 = jax.random.uniform(kw1, (D_HID, D_OUT), jnp.float32, -s1, s1)
    b1 = jax.random.uniform(kb1, (1, D_OUT), jnp.float32, -s1, s1)

    # BatchNorm affine params (perturbed so the affine path is exercised).
    g0 = 1.0 + 0.1 * jax.random.normal(kg0, (1, D_HID), jnp.float32)
    be0 = 0.1 * jax.random.normal(kbe0, (1, D_HID), jnp.float32)
    g1 = 1.0 + 0.1 * jax.random.normal(kg1, (1, D_OUT), jnp.float32)
    be1 = 0.1 * jax.random.normal(kbe1, (1, D_OUT), jnp.float32)

    # bf16 inputs fed to the kernel (halves x and weight DMA, native MXU path).
    x_bf16 = x.astype(jnp.bfloat16)
    w0_bf16 = w0.astype(jnp.bfloat16)
    w1_bf16 = w1.astype(jnp.bfloat16)

    # --- default f32 output --------------------------------------------------
    out = edge_module_forward(x_bf16, w0_bf16, g0, be0, w1_bf16, g1, be1)
    out = jax.block_until_ready(out)
    assert out.shape == (B, D_OUT) and out.dtype == jnp.float32

    # Tight check against an arithmetic-matched JAX reference.
    ref_matched = reference_forward_matched(x_bf16, w0_bf16, g0, be0,
                                            w1_bf16, g1, be1)
    assert jnp.allclose(out, ref_matched, atol=5e-3, rtol=5e-3)

    # Looser check against the exact f32 PyTorch-semantics forward
    # (difference is purely bf16 input/weight/activation quantization).
    ref_f32 = reference_forward_f32(x, w0, b0, g0, be0, w1, b1, g1, be1)
    assert jnp.allclose(out, ref_f32, atol=5e-2, rtol=5e-2)

    # --- optional bf16 output (halves writeback) ------------------------------
    out_bf16 = edge_module_forward(x_bf16, w0_bf16, g0, be0, w1_bf16, g1, be1,
                                   out_dtype=jnp.bfloat16)
    out_bf16 = jax.block_until_ready(out_bf16)
    assert out_bf16.shape == (B, D_OUT) and out_bf16.dtype == jnp.bfloat16
    assert jnp.allclose(out_bf16.astype(jnp.float32), ref_matched,
                        atol=2e-2, rtol=2e-2)

    print("KERNEL_OK")
</pallas_src>

<mosaic_0001>
module attributes {stable_mosaic.version = 11 : i64} {
  func.func @edge_kernel(%arg0: memref<64x512xbf16, #tpu.memory_space<vmem>>, %arg1: memref<512x512xbf16, #tpu.memory_space<vmem>>, %arg2: memref<1x512xf32, #tpu.memory_space<vmem>>, %arg3: memref<1x512xf32, #tpu.memory_space<vmem>>, %arg4: memref<512x256xbf16, #tpu.memory_space<any>>, %arg5: memref<1x256xf32, #tpu.memory_space<vmem>>, %arg6: memref<1x256xf32, #tpu.memory_space<vmem>>, %arg7: memref<64x256xf32, #tpu.memory_space<vmem>>, %arg8: memref<512x256xbf16, #tpu.memory_space<vmem>>, %arg9: memref<!tpu.dma_semaphore, #tpu.memory_space<semaphore_mem>>) attributes {dimension_semantics = [], scalar_prefetch = 0 : i64, scratch_operands = 2 : i64, tpu.core_type = #tpu.core_type<tc>} {
    tpu.enqueue_dma source(%arg4 : memref<512x256xbf16, #tpu.memory_space<any>>) target(%arg8 : memref<512x256xbf16, #tpu.memory_space<vmem>>) target_semaphore(%arg9 : memref<!tpu.dma_semaphore, #tpu.memory_space<semaphore_mem>>)
    %c0 = arith.constant 0 : index
    %c0_0 = arith.constant 0 : index
    %0 = vector.load %arg0[%c0, %c0_0] : memref<64x512xbf16, #tpu.memory_space<vmem>>, vector<64x512xbf16>
    %c0_1 = arith.constant 0 : index
    %c0_2 = arith.constant 0 : index
    %1 = vector.load %arg1[%c0_1, %c0_2] : memref<512x512xbf16, #tpu.memory_space<vmem>>, vector<512x512xbf16>
    %cst = arith.constant dense<0.000000e+00> : vector<64x512xf32>
    %2 = tpu.matmul %0, %1, %cst {dimension_numbers = #tpu.dot_dimension_numbers<[1], [0], [0], [1], [0, 0, 1, 1], [], []>} : vector<64x512xbf16>, vector<512x512xbf16>, vector<64x512xf32> -> vector<64x512xf32>
    %cst_3 = arith.constant dense<0.000000e+00> : vector<512xf32>
    %3 = vector.multi_reduction <add>, %2, %cst_3 [0] : vector<64x512xf32> to vector<512xf32>
    %4 = vector.shape_cast %3 : vector<512xf32> to vector<1x512xf32>
    %cst_4 = arith.constant 1.562500e-02 : f32
    %5 = vector.broadcast %cst_4 : f32 to vector<1x512xf32>
    %6 = arith.mulf %4, %5 : vector<1x512xf32>
    %7 = arith.mulf %2, %2 : vector<64x512xf32>
    %cst_5 = arith.constant dense<0.000000e+00> : vector<512xf32>
    %8 = vector.multi_reduction <add>, %7, %cst_5 [0] : vector<64x512xf32> to vector<512xf32>
    %9 = vector.shape_cast %8 : vector<512xf32> to vector<1x512xf32>
    %cst_6 = arith.constant 1.562500e-02 : f32
    %10 = vector.broadcast %cst_6 : f32 to vector<1x512xf32>
    %11 = arith.mulf %9, %10 : vector<1x512xf32>
    %12 = arith.mulf %6, %6 : vector<1x512xf32>
    %13 = arith.subf %11, %12 : vector<1x512xf32>
    %cst_7 = arith.constant 0.000000e+00 : f32
    %14 = vector.broadcast %cst_7 : f32 to vector<1x512xf32>
    %15 = arith.maximumf %13, %14 : vector<1x512xf32>
    %c0_8 = arith.constant 0 : index
    %c0_9 = arith.constant 0 : index
    %16 = vector.load %arg2[%c0_8, %c0_9] : memref<1x512xf32, #tpu.memory_space<vmem>>, vector<1x512xf32>
    %cst_10 = arith.constant 9.99999974E-6 : f32
    %17 = vector.broadcast %cst_10 : f32 to vector<1x512xf32>
    %18 = arith.addf %15, %17 : vector<1x512xf32>
    %19 = math.rsqrt %18 : vector<1x512xf32>
    %20 = arith.mulf %16, %19 : vector<1x512xf32>
    %c0_11 = arith.constant 0 : index
    %c0_12 = arith.constant 0 : index
    %21 = vector.load %arg3[%c0_11, %c0_12] : memref<1x512xf32, #tpu.memory_space<vmem>>, vector<1x512xf32>
    %22 = arith.mulf %6, %20 : vector<1x512xf32>
    %23 = arith.subf %21, %22 : vector<1x512xf32>
    %24 = vector.broadcast %20 : vector<1x512xf32> to vector<64x512xf32>
    %25 = arith.mulf %2, %24 : vector<64x512xf32>
    %26 = vector.broadcast %23 : vector<1x512xf32> to vector<64x512xf32>
    %27 = arith.addf %25, %26 : vector<64x512xf32>
    %cst_13 = arith.constant 0.000000e+00 : f32
    %28 = vector.broadcast %cst_13 : f32 to vector<64x512xf32>
    %29 = arith.maximumf %27, %28 : vector<64x512xf32>
    tpu.wait_dma2 semaphore(%arg9 : memref<!tpu.dma_semaphore, #tpu.memory_space<semaphore_mem>>) src(%arg4 : memref<512x256xbf16, #tpu.memory_space<any>>) dst(%arg8 : memref<512x256xbf16, #tpu.memory_space<vmem>>)
    %30 = arith.truncf %29 : vector<64x512xf32> to vector<64x512xbf16>
    %c0_14 = arith.constant 0 : index
    %c0_15 = arith.constant 0 : index
    %31 = vector.load %arg8[%c0_14, %c0_15] : memref<512x256xbf16, #tpu.memory_space<vmem>>, vector<512x256xbf16>
    %cst_16 = arith.constant dense<0.000000e+00> : vector<64x256xf32>
    %32 = tpu.matmul %30, %31, %cst_16 {dimension_numbers = #tpu.dot_dimension_numbers<[1], [0], [0], [1], [0, 0, 1, 1], [], []>} : vector<64x512xbf16>, vector<512x256xbf16>, vector<64x256xf32> -> vector<64x256xf32>
    %cst_17 = arith.constant dense<0.000000e+00> : vector<256xf32>
    %33 = vector.multi_reduction <add>, %32, %cst_17 [0] : vector<64x256xf32> to vector<256xf32>
    %34 = vector.shape_cast %33 : vector<256xf32> to vector<1x256xf32>
    %cst_18 = arith.constant 1.562500e-02 : f32
    %35 = vector.broadcast %cst_18 : f32 to vector<1x256xf32>
    %36 = arith.mulf %34, %35 : vector<1x256xf32>
    %37 = arith.mulf %32, %32 : vector<64x256xf32>
    %cst_19 = arith.constant dense<0.000000e+00> : vector<256xf32>
    %38 = vector.multi_reduction <add>, %37, %cst_19 [0] : vector<64x256xf32> to vector<256xf32>
    %39 = vector.shape_cast %38 : vector<256xf32> to vector<1x256xf32>
    %cst_20 = arith.constant 1.562500e-02 : f32
    %40 = vector.broadcast %cst_20 : f32 to vector<1x256xf32>
    %41 = arith.mulf %39, %40 : vector<1x256xf32>
    %42 = arith.mulf %36, %36 : vector<1x256xf32>
    %43 = arith.subf %41, %42 : vector<1x256xf32>
    %cst_21 = arith.constant 0.000000e+00 : f32
    %44 = vector.broadcast %cst_21 : f32 to vector<1x256xf32>
    %45 = arith.maximumf %43, %44 : vector<1x256xf32>
    %c0_22 = arith.constant 0 : index
    %c0_23 = arith.constant 0 : index
    %46 = vector.load %arg5[%c0_22, %c0_23] : memref<1x256xf32, #tpu.memory_space<vmem>>, vector<1x256xf32>
    %cst_24 = arith.constant 9.99999974E-6 : f32
    %47 = vector.broadcast %cst_24 : f32 to vector<1x256xf32>
    %48 = arith.addf %45, %47 : vector<1x256xf32>
    %49 = math.rsqrt %48 : vector<1x256xf32>
    %50 = arith.mulf %46, %49 : vector<1x256xf32>
    %c0_25 = arith.constant 0 : index
    %c0_26 = arith.constant 0 : index
    %51 = vector.load %arg6[%c0_25, %c0_26] : memref<1x256xf32, #tpu.memory_space<vmem>>, vector<1x256xf32>
    %52 = arith.mulf %36, %50 : vector<1x256xf32>
    %53 = arith.subf %51, %52 : vector<1x256xf32>
    %54 = vector.broadcast %50 : vector<1x256xf32> to vector<64x256xf32>
    %55 = arith.mulf %32, %54 : vector<64x256xf32>
    %56 = vector.broadcast %53 : vector<1x256xf32> to vector<64x256xf32>
    %57 = arith.addf %55, %56 : vector<64x256xf32>
    %c0_27 = arith.constant 0 : index
    %c0_28 = arith.constant 0 : index
    %58 = vector.load %arg7[%c0_27, %c0_28] : memref<64x256xf32, #tpu.memory_space<vmem>>, vector<64x256xf32>
    tpu.vector_store %arg7[%c0_27, %c0_28], %57 {strides = array<i32>} : memref<64x256xf32, #tpu.memory_space<vmem>>, vector<64x256xf32>,
    return
  }
}

</mosaic_0001>

<llo_original>
// kernel: tpu_custom_call.1
$region0: #{tpu_custom_call.1}
  #allocation0 [shape = 'u32[]', space=smem, size = 0x4, offset = 0x4, fixed_abs, tag = 'smem constant byte address 0x4 - core index']
  #allocation1 [shape = 'u32[144,128]{1,0:T(1,128)}', space=vmem, size = 0x12000, scoped, tag = 'internal scratch']
  #allocation2 [shape = 'bf16[512,256]{1,0:T(16,128)(2,1)}', space=vmem, size = 0x40000, scoped, tag = 'scratch operand']
  #allocation3 [shape = 's32[1]{0}', space=sflag, size = 0x4, scoped, tag = 'scratch operand']
  #allocation10 [shape = 's32[]', space=sflag, size = 0x4, offset = 0, fixed_abs, tag = 'sflag constant byte address 0x0 - dummy sync flag']
  %s0 = inlined_call_operand.hbm [shape: bf16[64,512], index: 0, kind: input, shape index: {}]
  %s1 = inlined_call_operand.hbm [shape: bf16[512,512], index: 1, kind: input, shape index: {}]
  %s2 = inlined_call_operand.vmem [shape: f32[1,512], index: 2, kind: input, shape index: {}]
  %s3 = inlined_call_operand.vmem [shape: f32[1,512], index: 3, kind: input, shape index: {}]
  %s4 = inlined_call_operand.hbm [shape: bf16[512,256], index: 4, kind: input, shape index: {}]
  %s5 = inlined_call_operand.vmem [shape: f32[1,256], index: 5, kind: input, shape index: {}]
  %s6 = inlined_call_operand.vmem [shape: f32[1,256], index: 6, kind: input, shape index: {}]
  %s7 = inlined_call_operand.hbm [shape: f32[64,256], index: 7, kind: output, shape index: {}]
  %s8 = sld [smem:[#allocation0]]
  $region42: #{tpu_custom_call.1} parent=0
    _
  %s10 = ssub.s32 1, %s8
  %s11 = scalar_select 0, %s10, %s8
  $region1: #{tpu_custom_call.1} parent=0
    #allocation4 [shape = 'u8[65536]{0}', space=vmem, size = 0x10000, scoped, tag = 'input window, operand 0, single buffered']
    #allocation5 [shape = 's32[1]{0}', space=sflag, size = 0x4, scoped, tag = 'scoped memory for tpu_custom_call.1']
    #allocation6 [shape = 's32[1]{0}', space=sflag, size = 0x4, scoped, tag = 'scoped memory for tpu_custom_call.1']
    #allocation7 [shape = 'u8[524288]{0}', space=vmem, size = 0x80000, scoped, tag = 'input window, operand 1, single buffered']
    #allocation8 [shape = 's32[1]{0}', space=sflag, size = 0x4, scoped, tag = 'scoped memory for tpu_custom_call.1']
    #allocation9 [shape = 'u8[65536]{0}', space=vmem, size = 0x10000, scoped, tag = 'output window, operand 0, single buffered']
    #allocation11 [shape = 'u32[9]{0}', space=smem, size = 0x24, scoped, tag = 'DMA stride descriptor']
    %12 = vsyncpa [#allocation5], 0
    %13 = vsyncpa [#allocation8], 0
    %14 = vsyncpa [#allocation6], 0
    // Predicated region
    $region2: #{tpu_custom_call.1} parent=1 // pred_check
      _
    $region3: #{tpu_custom_call.1} parent=1 // pred_check_branch
      %16 = sbr.rel (0) target = $region5
    $region4: #{tpu_custom_call.1} parent=1 // pred_region
      %s18 = ssub.s32 2048, 2048
      %19 = vsyncadd [#allocation5], %s18
      %s20 = sshll.u32 [#allocation4], 4
      %s21 = int_to_ptr.vmem [resolvable:$true] %s20
      %26 = dma.hbm_to_vmem [thread:$0]  %s0, 2048, %s21, [#allocation5], 256, 256, 16
    $region5: #{tpu_custom_call.1} parent=1 // pred_fallthru
      _
    // Predicated region
    $region6: #{tpu_custom_call.1} parent=1 // pred_check
      _
    $region7: #{tpu_custom_call.1} parent=1 // pred_check_branch
      %28 = sbr.rel (0) target = $region9
    $region8: #{tpu_custom_call.1} parent=1 // pred_region
      %s30 = ssub.s32 16384, 16384
      %31 = vsyncadd [#allocation8], %s30
      %s32 = sshll.u32 [#allocation7], 4
      %s33 = int_to_ptr.vmem [resolvable:$true] %s32
      %38 = dma.hbm_to_vmem [thread:$0]  %s1, 16384, %s33, [#allocation8], 256, 256, 16
    $region9: #{tpu_custom_call.1} parent=1 // pred_fallthru
      _
    // Predicated region
    $region10: #{tpu_custom_call.1} parent=1 // pred_check
      _
    $region11: #{tpu_custom_call.1} parent=1 // pred_check_branch
      %40 = sbr.rel (0) target = $region13
    $region12: #{tpu_custom_call.1} parent=1 // pred_region
      _
    $region13: #{tpu_custom_call.1} parent=1 // pred_fallthru
      _
    // Predicated region
    $region14: #{tpu_custom_call.1} parent=1 // pred_check
      _
    $region15: #{tpu_custom_call.1} parent=1 // pred_check_branch
      %42 = sbr.rel (0) target = $region17
    $region16: #{tpu_custom_call.1} parent=1 // pred_region
      _
    $region17: #{tpu_custom_call.1} parent=1 // pred_fallthru
      _
    // Predicated region
    $region18: #{tpu_custom_call.1} parent=1 // pred_check
      _
    $region19: #{tpu_custom_call.1} parent=1 // pred_check_branch
      %44 = sbr.rel (0) target = $region21
    $region20: #{tpu_custom_call.1} parent=1 // pred_region
      _
    $region21: #{tpu_custom_call.1} parent=1 // pred_fallthru
      _
    // Predicated region
    $region22: #{tpu_custom_call.1} parent=1 // pred_check
      _
    $region23: #{tpu_custom_call.1} parent=1 // pred_check_branch
      %46 = sbr.rel (0) target = $region25
    $region24: #{tpu_custom_call.1} parent=1 // pred_region
      _
    $region25: #{tpu_custom_call.1} parent=1 // pred_fallthru
      _
    // Predicated region
    $region26: #{tpu_custom_call.1} parent=1 // pred_check
      _
    $region27: #{tpu_custom_call.1} parent=1 // pred_check_branch
      %48 = sbr.rel (0) target = $region29
    $region28: #{tpu_custom_call.1} parent=1 // pred_region
      %49 = dma.done [#allocation5], 2048
    $region29: #{tpu_custom_call.1} parent=1 // pred_fallthru
      _
    // Predicated region
    $region30: #{tpu_custom_call.1} parent=1 // pred_check
      _
    $region31: #{tpu_custom_call.1} parent=1 // pred_check_branch
      %51 = sbr.rel (0) target = $region33
    $region32: #{tpu_custom_call.1} parent=1 // pred_region
      %52 = dma.done [#allocation8], 16384
    $region33: #{tpu_custom_call.1} parent=1 // pred_fallthru
      _
    %s54 = sshll.u32 1, 14
    %s55 = sxor.u32 4294967295, %s54
    %s57 = sld [smem:[#allocation0]]
    %s58 = sadd.s32 2, %s57
    %s60 = sshll.u32 7, 26
    %s61 = sxor.u32 4294967295, %s60
    %s62 = sand.u32 0, %s61
    %s63 = sshll.u32 %s58, 26
    %s64 = sor.u32 %s62, %s63
    %s65 = sshll.u32 [#allocation2], 4
    %s66 = int_to_ptr.vmem [resolvable:$true] %s65
    %69 = sst [smem:[#allocation11]] 256
    %s70 = scalar_lea.smem [#allocation11], 1
    %71 = sst [smem:[%s70]] 256
    %s72 = scalar_lea.smem [#allocation11], 2
    %73 = sst [smem:[%s72]] 2
    %s74 = scalar_lea.smem [#allocation11], 3
    %75 = sst [smem:[%s74]] 64
    %s76 = scalar_lea.smem [#allocation11], 4
    %77 = sst [smem:[%s76]] 128
    %s78 = scalar_lea.smem [#allocation11], 5
    %79 = sst [smem:[%s78]] 2
    %s80 = scalar_lea.smem [#allocation11], 6
    %81 = sst [smem:[%s80]] 128
    %s82 = scalar_lea.smem [#allocation11], 7
    %83 = sst [smem:[%s82]] 64
    %s84 = scalar_lea.smem [#allocation11], 8
    %85 = sst [smem:[%s84]] 4
    %87 = dma.general %s4, 8192, %s66, [#allocation3], [#allocation10], [#allocation11], %s64, 0
    %v88 = vld [vmem:[#allocation4] sm:$0xff]
    %v89 = vld [vmem:[#allocation4 + $0x8] sm:$0xff]
    %v90 = vld [vmem:[#allocation4 + $0x10] sm:$0xff]
    %v91 = vld [vmem:[#allocation4 + $0x18] sm:$0xff]
    %v92 = vld [vmem:[#allocation4 + $0x20] sm:$0xff]
    %v93 = vld [vmem:[#allocation4 + $0x28] sm:$0xff]
    %v94 = vld [vmem:[#allocation4 + $0x30] sm:$0xff]
    %v95 = vld [vmem:[#allocation4 + $0x38] sm:$0xff]
    %v96 = vld [vmem:[#allocation4 + $0x40] sm:$0xff]
    %v97 = vld [vmem:[#allocation4 + $0x48] sm:$0xff]
    %v98 = vld [vmem:[#allocation4 + $0x50] sm:$0xff]
    %v99 = vld [vmem:[#allocation4 + $0x58] sm:$0xff]
    %v100 = vld [vmem:[#allocation4 + $0x60] sm:$0xff]
    %v101 = vld [vmem:[#allocation4 + $0x68] sm:$0xff]
    %v102 = vld [vmem:[#allocation4 + $0x70] sm:$0xff]
    %v103 = vld [vmem:[#allocation4 + $0x78] sm:$0xff]
    %v104 = vld [vmem:[#allocation7] sm:$0xff]
    %v105 = vld [vmem:[#allocation7 + $0x8] sm:$0xff]
    %v106 = vld [vmem:[#allocation7 + $0x10] sm:$0xff]
    %v107 = vld [vmem:[#allocation7 + $0x18] sm:$0xff]
    %v108 = vld [vmem:[#allocation7 + $0x20] sm:$0xff]
    %v109 = vld [vmem:[#allocation7 + $0x28] sm:$0xff]
    %v110 = vld [vmem:[#allocation7 + $0x30] sm:$0xff]
    %v111 = vld [vmem:[#allocation7 + $0x38] sm:$0xff]
    %v112 = vld [vmem:[#allocation7 + $0x40] sm:$0xff]
    %v113 = vld [vmem:[#allocation7 + $0x48] sm:$0xff]
    %v114 = vld [vmem:[#allocation7 + $0x50] sm:$0xff]
    %v115 = vld [vmem:[#allocation7 + $0x58] sm:$0xff]
    %v116 = vld [vmem:[#allocation7 + $0x60] sm:$0xff]
    %v117 = vld [vmem:[#allocation7 + $0x68] sm:$0xff]
    %v118 = vld [vmem:[#allocation7 + $0x70] sm:$0xff]
    %v119 = vld [vmem:[#allocation7 + $0x78] sm:$0xff]
    %v120 = vld [vmem:[#allocation7 + $0x80] sm:$0xff]
    %v121 = vld [vmem:[#allocation7 + $0x88] sm:$0xff]
    %v122 = vld [vmem:[#allocation7 + $0x90] sm:$0xff]
    %v123 = vld [vmem:[#allocation7 + $0x98] sm:$0xff]
    %v124 = vld [vmem:[#allocation7 + $0xa0] sm:$0xff]
    %v125 = vld [vmem:[#allocation7 + $0xa8] sm:$0xff]
    %v126 = vld [vmem:[#allocation7 + $0xb0] sm:$0xff]
    %v127 = vld [vmem:[#allocation7 + $0xb8] sm:$0xff]
    %v128 = vld [vmem:[#allocation7 + $0xc0] sm:$0xff]
    %v129 = vld [vmem:[#allocation7 + $0xc8] sm:$0xff]
    %v130 = vld [vmem:[#allocation7 + $0xd0] sm:$0xff]
    %v131 = vld [vmem:[#allocation7 + $0xd8] sm:$0xff]
    %v132 = vld [vmem:[#allocation7 + $0xe0] sm:$0xff]
    %v133 = vld [vmem:[#allocation7 + $0xe8] sm:$0xff]
    %v134 = vld [vmem:[#allocation7 + $0xf0] sm:$0xff]
    %v135 = vld [vmem:[#allocation7 + $0xf8] sm:$0xff]
    %v136 = vld [vmem:[#allocation7 + $0x100] sm:$0xff]
    %v137 = vld [vmem:[#allocation7 + $0x108] sm:$0xff]
    %v138 = vld [vmem:[#allocation7 + $0x110] sm:$0xff]
    %v139 = vld [vmem:[#allocation7 + $0x118] sm:$0xff]
    %v140 = vld [vmem:[#allocation7 + $0x120] sm:$0xff]
    %v141 = vld [vmem:[#allocation7 + $0x128] sm:$0xff]
    %v142 = vld [vmem:[#allocation7 + $0x130] sm:$0xff]
    %v143 = vld [vmem:[#allocation7 + $0x138] sm:$0xff]
    %v144 = vld [vmem:[#allocation7 + $0x140] sm:$0xff]
    %v145 = vld [vmem:[#allocation7 + $0x148] sm:$0xff]
    %v146 = vld [vmem:[#allocation7 + $0x150] sm:$0xff]
    %v147 = vld [vmem:[#allocation7 + $0x158] sm:$0xff]
    %v148 = vld [vmem:[#allocation7 + $0x160] sm:$0xff]
    %v149 = vld [vmem:[#allocation7 + $0x168] sm:$0xff]
    %v150 = vld [vmem:[#allocation7 + $0x170] sm:$0xff]
    %v151 = vld [vmem:[#allocation7 + $0x178] sm:$0xff]
    %v152 = vld [vmem:[#allocation7 + $0x180] sm:$0xff]
    %v153 = vld [vmem:[#allocation7 + $0x188] sm:$0xff]
    %v154 = vld [vmem:[#allocation7 + $0x190] sm:$0xff]
    %v155 = vld [vmem:[#allocation7 + $0x198] sm:$0xff]
    %v156 = vld [vmem:[#allocation7 + $0x1a0] sm:$0xff]
    %v157 = vld [vmem:[#allocation7 + $0x1a8] sm:$0xff]
    %v158 = vld [vmem:[#allocation7 + $0x1b0] sm:$0xff]
    %v159 = vld [vmem:[#allocation7 + $0x1b8] sm:$0xff]
    %v160 = vld [vmem:[#allocation7 + $0x1c0] sm:$0xff]
    %v161 = vld [vmem:[#allocation7 + $0x1c8] sm:$0xff]
    %v162 = vld [vmem:[#allocation7 + $0x1d0] sm:$0xff]
    %v163 = vld [vmem:[#allocation7 + $0x1d8] sm:$0xff]
    %v164 = vld [vmem:[#allocation7 + $0x1e0] sm:$0xff]
    %v165 = vld [vmem:[#allocation7 + $0x1e8] sm:$0xff]
    %v166 = vld [vmem:[#allocation7 + $0x1f0] sm:$0xff]
    %v167 = vld [vmem:[#allocation7 + $0x1f8] sm:$0xff]
    %v168 = vld [vmem:[#allocation7 + $0x200] sm:$0xff]
    %v169 = vld [vmem:[#allocation7 + $0x208] sm:$0xff]
    %v170 = vld [vmem:[#allocation7 + $0x210] sm:$0xff]
    %v171 = vld [vmem:[#allocation7 + $0x218] sm:$0xff]
    %v172 = vld [vmem:[#allocation7 + $0x220] sm:$0xff]
    %v173 = vld [vmem:[#allocation7 + $0x228] sm:$0xff]
    %v174 = vld [vmem:[#allocation7 + $0x230] sm:$0xff]
    %v175 = vld [vmem:[#allocation7 + $0x238] sm:$0xff]
    %v176 = vld [vmem:[#allocation7 + $0x240] sm:$0xff]
    %v177 = vld [vmem:[#allocation7 + $0x248] sm:$0xff]
    %v178 = vld [vmem:[#allocation7 + $0x250] sm:$0xff]
    %v179 = vld [vmem:[#allocation7 + $0x258] sm:$0xff]
    %v180 = vld [vmem:[#allocation7 + $0x260] sm:$0xff]
    %v181 = vld [vmem:[#allocation7 + $0x268] sm:$0xff]
    %v182 = vld [vmem:[#allocation7 + $0x270] sm:$0xff]
    %v183 = vld [vmem:[#allocation7 + $0x278] sm:$0xff]
    %v184 = vld [vmem:[#allocation7 + $0x280] sm:$0xff]
    %v185 = vld [vmem:[#allocation7 + $0x288] sm:$0xff]
    %v186 = vld [vmem:[#allocation7 + $0x290] sm:$0xff]
    %v187 = vld [vmem:[#allocation7 + $0x298] sm:$0xff]
    %v188 = vld [vmem:[#allocation7 + $0x2a0] sm:$0xff]
    %v189 = vld [vmem:[#allocation7 + $0x2a8] sm:$0xff]
    %v190 = vld [vmem:[#allocation7 + $0x2b0] sm:$0xff]
    %v191 = vld [vmem:[#allocation7 + $0x2b8] sm:$0xff]
    %v192 = vld [vmem:[#allocation7 + $0x2c0] sm:$0xff]
    %v193 = vld [vmem:[#allocation7 + $0x2c8] sm:$0xff]
    %v194 = vld [vmem:[#allocation7 + $0x2d0] sm:$0xff]
    %v195 = vld [vmem:[#allocation7 + $0x2d8] sm:$0xff]
    %v196 = vld [vmem:[#allocation7 + $0x2e0] sm:$0xff]
    %v197 = vld [vmem:[#allocation7 + $0x2e8] sm:$0xff]
    %v198 = vld [vmem:[#allocation7 + $0x2f0] sm:$0xff]
    %v199 = vld [vmem:[#allocation7 + $0x2f8] sm:$0xff]
    %v200 = vld [vmem:[#allocation7 + $0x300] sm:$0xff]
    %v201 = vld [vmem:[#allocation7 + $0x308] sm:$0xff]
    %v202 = vld [vmem:[#allocation7 + $0x310] sm:$0xff]
    %v203 = vld [vmem:[#allocation7 + $0x318] sm:$0xff]
    %v204 = vld [vmem:[#allocation7 + $0x320] sm:$0xff]
    %v205 = vld [vmem:[#allocation7 + $0x328] sm:$0xff]
    %v206 = vld [vmem:[#allocation7 + $0x330] sm:$0xff]
    %v207 = vld [vmem:[#allocation7 + $0x338] sm:$0xff]
    %v208 = vld [vmem:[#allocation7 + $0x340] sm:$0xff]
    %v209 = vld [vmem:[#allocation7 + $0x348] sm:$0xff]
    %v210 = vld [vmem:[#allocation7 + $0x350] sm:$0xff]
    %v211 = vld [vmem:[#allocation7 + $0x358] sm:$0xff]
    %v212 = vld [vmem:[#allocation7 + $0x360] sm:$0xff]
    %v213 = vld [vmem:[#allocation7 + $0x368] sm:$0xff]
    %v214 = vld [vmem:[#allocation7 + $0x370] sm:$0xff]
    %v215 = vld [vmem:[#allocation7 + $0x378] sm:$0xff]
    %v216 = vld [vmem:[#allocation7 + $0x380] sm:$0xff]
    %v217 = vld [vmem:[#allocation7 + $0x388] sm:$0xff]
    %v218 = vld [vmem:[#allocation7 + $0x390] sm:$0xff]
    %v219 = vld [vmem:[#allocation7 + $0x398] sm:$0xff]
    %v220 = vld [vmem:[#allocation7 + $0x3a0] sm:$0xff]
    %v221 = vld [vmem:[#allocation7 + $0x3a8] sm:$0xff]
    %v222 = vld [vmem:[#allocation7 + $0x3b0] sm:$0xff]
    %v223 = vld [vmem:[#allocation7 + $0x3b8] sm:$0xff]
    %v224 = vld [vmem:[#allocation7 + $0x3c0] sm:$0xff]
    %v225 = vld [vmem:[#allocation7 + $0x3c8] sm:$0xff]
    %v226 = vld [vmem:[#allocation7 + $0x3d0] sm:$0xff]
    %v227 = vld [vmem:[#allocation7 + $0x3d8] sm:$0xff]
    %v228 = vld [vmem:[#allocation7 + $0x3e0] sm:$0xff]
    %v229 = vld [vmem:[#allocation7 + $0x3e8] sm:$0xff]
    %v230 = vld [vmem:[#allocation7 + $0x3f0] sm:$0xff]
    %v231 = vld [vmem:[#allocation7 + $0x3f8] sm:$0xff]
    %v248 = vunpack.c.l.b16 %v88
    %v249 = vunpack.c.h.b16 %v88
    %v250 = vunpack.c.l.b16 %v89
    %v251 = vunpack.c.h.b16 %v89
    %v252 = vunpack.c.l.b16 %v90
    %v253 = vunpack.c.h.b16 %v90
    %v254 = vunpack.c.l.b16 %v91
    %v255 = vunpack.c.h.b16 %v91
    %v256 = vunpack.c.l.b16 %v92
    %v257 = vunpack.c.h.b16 %v92
    %v258 = vunpack.c.l.b16 %v93
    %v259 = vunpack.c.h.b16 %v93
    %v260 = vunpack.c.l.b16 %v94
    %v261 = vunpack.c.h.b16 %v94
    %v262 = vunpack.c.l.b16 %v95
    %v263 = vunpack.c.h.b16 %v95
    %v264 = vunpack.c.l.b16 %v96
    %v265 = vunpack.c.h.b16 %v96
    %v266 = vunpack.c.l.b16 %v97
    %v267 = vunpack.c.h.b16 %v97
    %v268 = vunpack.c.l.b16 %v98
    %v269 = vunpack.c.h.b16 %v98
    %v270 = vunpack.c.l.b16 %v99
    %v271 = vunpack.c.h.b16 %v99
    %v272 = vunpack.c.l.b16 %v100
    %v273 = vunpack.c.h.b16 %v100
    %v274 = vunpack.c.l.b16 %v101
    %v275 = vunpack.c.h.b16 %v101
    %v276 = vunpack.c.l.b16 %v102
    %v277 = vunpack.c.h.b16 %v102
    %v278 = vunpack.c.l.b16 %v103
    %v279 = vunpack.c.h.b16 %v103
    %v280 = vpack.c.b16 %v252, %v248
    %v281 = vpack.c.b16 %v253, %v249
    %v282 = vpack.c.b16 %v254, %v250
    %v283 = vpack.c.b16 %v255, %v251
    %v284 = vpack.c.b16 %v260, %v256
    %v285 = vpack.c.b16 %v261, %v257
    %v286 = vpack.c.b16 %v262, %v258
    %v287 = vpack.c.b16 %v263, %v259
    %v288 = vpack.c.b16 %v268, %v264
    %v289 = vpack.c.b16 %v269, %v265
    %v290 = vpack.c.b16 %v270, %v266
    %v291 = vpack.c.b16 %v271, %v267
    %v292 = vpack.c.b16 %v276, %v272
    %v293 = vpack.c.b16 %v277, %v273
    %v294 = vpack.c.b16 %v278, %v274
    %v295 = vpack.c.b16 %v279, %v275
    %v440 = vunpack.c.l.b16 %v104
    %v441 = vunpack.c.h.b16 %v104
    %v442 = vunpack.c.l.b16 %v105
    %v443 = vunpack.c.h.b16 %v105
    %v444 = vunpack.c.l.b16 %v106
    %v445 = vunpack.c.h.b16 %v106
    %v446 = vunpack.c.l.b16 %v107
    %v447 = vunpack.c.h.b16 %v107
    %v448 = vunpack.c.l.b16 %v108
    %v449 = vunpack.c.h.b16 %v108
    %v450 = vunpack.c.l.b16 %v109
    %v451 = vunpack.c.h.b16 %v109
    %v452 = vunpack.c.l.b16 %v110
    %v453 = vunpack.c.h.b16 %v110
    %v454 = vunpack.c.l.b16 %v111
    %v455 = vunpack.c.h.b16 %v111
    %v456 = vunpack.c.l.b16 %v112
    %v457 = vunpack.c.h.b16 %v112
    %v458 = vunpack.c.l.b16 %v113
    %v459 = vunpack.c.h.b16 %v113
    %v460 = vunpack.c.l.b16 %v114
    %v461 = vunpack.c.h.b16 %v114
    %v462 = vunpack.c.l.b16 %v115
    %v463 = vunpack.c.h.b16 %v115
    %v464 = vunpack.c.l.b16 %v116
    %v465 = vunpack.c.h.b16 %v116
    %v466 = vunpack.c.l.b16 %v117
    %v467 = vunpack.c.h.b16 %v117
    %v468 = vunpack.c.l.b16 %v118
    %v469 = vunpack.c.h.b16 %v118
    %v470 = vunpack.c.l.b16 %v119
    %v471 = vunpack.c.h.b16 %v119
    %v472 = vunpack.c.l.b16 %v120
    %v473 = vunpack.c.h.b16 %v120
    %v474 = vunpack.c.l.b16 %v121
    %v475 = vunpack.c.h.b16 %v121
    %v476 = vunpack.c.l.b16 %v122
    %v477 = vunpack.c.h.b16 %v122
    %v478 = vunpack.c.l.b16 %v123
    %v479 = vunpack.c.h.b16 %v123
    %v480 = vunpack.c.l.b16 %v124
    %v481 = vunpack.c.h.b16 %v124
    %v482 = vunpack.c.l.b16 %v125
    %v483 = vunpack.c.h.b16 %v125
    %v484 = vunpack.c.l.b16 %v126
    %v485 = vunpack.c.h.b16 %v126
    %v486 = vunpack.c.l.b16 %v127
    %v487 = vunpack.c.h.b16 %v127
    %v488 = vunpack.c.l.b16 %v128
    %v489 = vunpack.c.h.b16 %v128
    %v490 = vunpack.c.l.b16 %v129
    %v491 = vunpack.c.h.b16 %v129
    %v492 = vunpack.c.l.b16 %v130
    %v493 = vunpack.c.h.b16 %v130
    %v494 = vunpack.c.l.b16 %v131
    %v495 = vunpack.c.h.b16 %v131
    %v496 = vunpack.c.l.b16 %v132
    %v497 = vunpack.c.h.b16 %v132
    %v498 = vunpack.c.l.b16 %v133
    %v499 = vunpack.c.h.b16 %v133
    %v500 = vunpack.c.l.b16 %v134
    %v501 = vunpack.c.h.b16 %v134
    %v502 = vunpack.c.l.b16 %v135
    %v503 = vunpack.c.h.b16 %v135
    %v504 = vunpack.c.l.b16 %v136
    %v505 = vunpack.c.h.b16 %v136
    %v506 = vunpack.c.l.b16 %v137
    %v507 = vunpack.c.h.b16 %v137
    %v508 = vunpack.c.l.b16 %v138
    %v509 = vunpack.c.h.b16 %v138
    %v510 = vunpack.c.l.b16 %v139
    %v511 = vunpack.c.h.b16 %v139
    %v512 = vunpack.c.l.b16 %v140
    %v513 = vunpack.c.h.b16 %v140
    %v514 = vunpack.c.l.b16 %v141
    %v515 = vunpack.c.h.b16 %v141
    %v516 = vunpack.c.l.b16 %v142
    %v517 = vunpack.c.h.b16 %v142
    %v518 = vunpack.c.l.b16 %v143
    %v519 = vunpack.c.h.b16 %v143
    %v520 = vunpack.c.l.b16 %v144
    %v521 = vunpack.c.h.b16 %v144
    %v522 = vunpack.c.l.b16 %v145
    %v523 = vunpack.c.h.b16 %v145
    %v524 = vunpack.c.l.b16 %v146
    %v525 = vunpack.c.h.b16 %v146
    %v526 = vunpack.c.l.b16 %v147
    %v527 = vunpack.c.h.b16 %v147
    %v528 = vunpack.c.l.b16 %v148
    %v529 = vunpack.c.h.b16 %v148
    %v530 = vunpack.c.l.b16 %v149
    %v531 = vunpack.c.h.b16 %v149
    %v532 = vunpack.c.l.b16 %v150
    %v533 = vunpack.c.h.b16 %v150
    %v534 = vunpack.c.l.b16 %v151
    %v535 = vunpack.c.h.b16 %v151
    %v536 = vunpack.c.l.b16 %v152
    %v537 = vunpack.c.h.b16 %v152
    %v538 = vunpack.c.l.b16 %v153
    %v539 = vunpack.c.h.b16 %v153
    %v540 = vunpack.c.l.b16 %v154
    %v541 = vunpack.c.h.b16 %v154
    %v542 = vunpack.c.l.b16 %v155
    %v543 = vunpack.c.h.b16 %v155
    %v544 = vunpack.c.l.b16 %v156
    %v545 = vunpack.c.h.b16 %v156
    %v546 = vunpack.c.l.b16 %v157
    %v547 = vunpack.c.h.b16 %v157
    %v548 = vunpack.c.l.b16 %v158
    %v549 = vunpack.c.h.b16 %v158
    %v550 = vunpack.c.l.b16 %v159
    %v551 = vunpack.c.h.b16 %v159
    %v552 = vunpack.c.l.b16 %v160
    %v553 = vunpack.c.h.b16 %v160
    %v554 = vunpack.c.l.b16 %v161
    %v555 = vunpack.c.h.b16 %v161
    %v556 = vunpack.c.l.b16 %v162
    %v557 = vunpack.c.h.b16 %v162
    %v558 = vunpack.c.l.b16 %v163
    %v559 = vunpack.c.h.b16 %v163
    %v560 = vunpack.c.l.b16 %v164
    %v561 = vunpack.c.h.b16 %v164
    %v562 = vunpack.c.l.b16 %v165
    %v563 = vunpack.c.h.b16 %v165
    %v564 = vunpack.c.l.b16 %v166
    %v565 = vunpack.c.h.b16 %v166
    %v566 = vunpack.c.l.b16 %v167
    %v567 = vunpack.c.h.b16 %v167
    %v568 = vunpack.c.l.b16 %v168
    %v569 = vunpack.c.h.b16 %v168
    %v570 = vunpack.c.l.b16 %v169
    %v571 = vunpack.c.h.b16 %v169
    %v572 = vunpack.c.l.b16 %v170
    %v573 = vunpack.c.h.b16 %v170
    %v574 = vunpack.c.l.b16 %v171
    %v575 = vunpack.c.h.b16 %v171
    %v576 = vunpack.c.l.b16 %v172
    %v577 = vunpack.c.h.b16 %v172
    %v578 = vunpack.c.l.b16 %v173
    %v579 = vunpack.c.h.b16 %v173
    %v580 = vunpack.c.l.b16 %v174
    %v581 = vunpack.c.h.b16 %v174
    %v582 = vunpack.c.l.b16 %v175
    %v583 = vunpack.c.h.b16 %v175
    %v584 = vunpack.c.l.b16 %v176
    %v585 = vunpack.c.h.b16 %v176
    %v586 = vunpack.c.l.b16 %v177
    %v587 = vunpack.c.h.b16 %v177
    %v588 = vunpack.c.l.b16 %v178
    %v589 = vunpack.c.h.b16 %v178
    %v590 = vunpack.c.l.b16 %v179
    %v591 = vunpack.c.h.b16 %v179
    %v592 = vunpack.c.l.b16 %v180
    %v593 = vunpack.c.h.b16 %v180
    %v594 = vunpack.c.l.b16 %v181
    %v595 = vunpack.c.h.b16 %v181
    %v596 = vunpack.c.l.b16 %v182
    %v597 = vunpack.c.h.b16 %v182
    %v598 = vunpack.c.l.b16 %v183
    %v599 = vunpack.c.h.b16 %v183
    %v600 = vunpack.c.l.b16 %v184
    %v601 = vunpack.c.h.b16 %v184
    %v602 = vunpack.c.l.b16 %v185
    %v603 = vunpack.c.h.b16 %v185
    %v604 = vunpack.c.l.b16 %v186
    %v605 = vunpack.c.h.b16 %v186
    %v606 = vunpack.c.l.b16 %v187
    %v607 = vunpack.c.h.b16 %v187
    %v608 = vunpack.c.l.b16 %v188
    %v609 = vunpack.c.h.b16 %v188
    %v610 = vunpack.c.l.b16 %v189
    %v611 = vunpack.c.h.b16 %v189
    %v612 = vunpack.c.l.b16 %v190
    %v613 = vunpack.c.h.b16 %v190
    %v614 = vunpack.c.l.b16 %v191
    %v615 = vunpack.c.h.b16 %v191
    %v616 = vunpack.c.l.b16 %v192
    %v617 = vunpack.c.h.b16 %v192
    %v618 = vunpack.c.l.b16 %v193
    %v619 = vunpack.c.h.b16 %v193
    %v620 = vunpack.c.l.b16 %v194
    %v621 = vunpack.c.h.b16 %v194
    %v622 = vunpack.c.l.b16 %v195
    %v623 = vunpack.c.h.b16 %v195
    %v624 = vunpack.c.l.b16 %v196
    %v625 = vunpack.c.h.b16 %v196
    %v626 = vunpack.c.l.b16 %v197
    %v627 = vunpack.c.h.b16 %v197
    %v628 = vunpack.c.l.b16 %v198
    %v629 = vunpack.c.h.b16 %v198
    %v630 = vunpack.c.l.b16 %v199
    %v631 = vunpack.c.h.b16 %v199
    %v632 = vunpack.c.l.b16 %v200
    %v633 = vunpack.c.h.b16 %v200
    %v634 = vunpack.c.l.b16 %v201
    %v635 = vunpack.c.h.b16 %v201
    %v636 = vunpack.c.l.b16 %v202
    %v637 = vunpack.c.h.b16 %v202
    %v638 = vunpack.c.l.b16 %v203
    %v639 = vunpack.c.h.b16 %v203
    %v640 = vunpack.c.l.b16 %v204
    %v641 = vunpack.c.h.b16 %v204
    %v642 = vunpack.c.l.b16 %v205
    %v643 = vunpack.c.h.b16 %v205
    %v644 = vunpack.c.l.b16 %v206
    %v645 = vunpack.c.h.b16 %v206
    %v646 = vunpack.c.l.b16 %v207
    %v647 = vunpack.c.h.b16 %v207
    %v648 = vunpack.c.l.b16 %v208
    %v649 = vunpack.c.h.b16 %v208
    %v650 = vunpack.c.l.b16 %v209
    %v651 = vunpack.c.h.b16 %v209
    %v652 = vunpack.c.l.b16 %v210
    %v653 = vunpack.c.h.b16 %v210
    %v654 = vunpack.c.l.b16 %v211
    %v655 = vunpack.c.h.b16 %v211
    %v656 = vunpack.c.l.b16 %v212
    %v657 = vunpack.c.h.b16 %v212
    %v658 = vunpack.c.l.b16 %v213
    %v659 = vunpack.c.h.b16 %v213
    %v660 = vunpack.c.l.b16 %v214
    %v661 = vunpack.c.h.b16 %v214
    %v662 = vunpack.c.l.b16 %v215
    %v663 = vunpack.c.h.b16 %v215
    %v664 = vunpack.c.l.b16 %v216
    %v665 = vunpack.c.h.b16 %v216
    %v666 = vunpack.c.l.b16 %v217
    %v667 = vunpack.c.h.b16 %v217
    %v668 = vunpack.c.l.b16 %v218
    %v669 = vunpack.c.h.b16 %v218
    %v670 = vunpack.c.l.b16 %v219
    %v671 = vunpack.c.h.b16 %v219
    %v672 = vunpack.c.l.b16 %v220
    %v673 = vunpack.c.h.b16 %v220
    %v674 = vunpack.c.l.b16 %v221
    %v675 = vunpack.c.h.b16 %v221
    %v676 = vunpack.c.l.b16 %v222
    %v677 = vunpack.c.h.b16 %v222
    %v678 = vunpack.c.l.b16 %v223
    %v679 = vunpack.c.h.b16 %v223
    %v680 = vunpack.c.l.b16 %v224
    %v681 = vunpack.c.h.b16 %v224
    %v682 = vunpack.c.l.b16 %v225
    %v683 = vunpack.c.h.b16 %v225
    %v684 = vunpack.c.l.b16 %v226
    %v685 = vunpack.c.h.b16 %v226
    %v686 = vunpack.c.l.b16 %v227
    %v687 = vunpack.c.h.b16 %v227
    %v688 = vunpack.c.l.b16 %v228
    %v689 = vunpack.c.h.b16 %v228
    %v690 = vunpack.c.l.b16 %v229
    %v691 = vunpack.c.h.b16 %v229
    %v692 = vunpack.c.l.b16 %v230
    %v693 = vunpack.c.h.b16 %v230
    %v694 = vunpack.c.l.b16 %v231
    %v695 = vunpack.c.h.b16 %v231
    %v696 = vpack.c.b16 %v444, %v440
    %v697 = vpack.c.b16 %v445, %v441
    %v698 = vpack.c.b16 %v446, %v442
    %v699 = vpack.c.b16 %v447, %v443
    %v700 = vpack.c.b16 %v452, %v448
    %v701 = vpack.c.b16 %v453, %v449
    %v702 = vpack.c.b16 %v454, %v450
    %v703 = vpack.c.b16 %v455, %v451
    %v704 = vpack.c.b16 %v460, %v456
    %v705 = vpack.c.b16 %v461, %v457
    %v706 = vpack.c.b16 %v462, %v458
    %v707 = vpack.c.b16 %v463, %v459
    %v708 = vpack.c.b16 %v468, %v464
    %v709 = vpack.c.b16 %v469, %v465
    %v710 = vpack.c.b16 %v470, %v466
    %v711 = vpack.c.b16 %v471, %v467
    %v712 = vpack.c.b16 %v476, %v472
    %v713 = vpack.c.b16 %v477, %v473
    %v714 = vpack.c.b16 %v478, %v474
    %v715 = vpack.c.b16 %v479, %v475
    %v716 = vpack.c.b16 %v484, %v480
    %v717 = vpack.c.b16 %v485, %v481
    %v718 = vpack.c.b16 %v486, %v482
    %v719 = vpack.c.b16 %v487, %v483
    %v720 = vpack.c.b16 %v492, %v488
    %v721 = vpack.c.b16 %v493, %v489
    %v722 = vpack.c.b16 %v494, %v490
    %v723 = vpack.c.b16 %v495, %v491
    %v724 = vpack.c.b16 %v500, %v496
    %v725 = vpack.c.b16 %v501, %v497
    %v726 = vpack.c.b16 %v502, %v498
    %v727 = vpack.c.b16 %v503, %v499
    %v728 = vpack.c.b16 %v508, %v504
    %v729 = vpack.c.b16 %v509, %v505
    %v730 = vpack.c.b16 %v510, %v506
    %v731 = vpack.c.b16 %v511, %v507
    %v732 = vpack.c.b16 %v516, %v512
    %v733 = vpack.c.b16 %v517, %v513
    %v734 = vpack.c.b16 %v518, %v514
    %v735 = vpack.c.b16 %v519, %v515
    %v736 = vpack.c.b16 %v524, %v520
    %v737 = vpack.c.b16 %v525, %v521
    %v738 = vpack.c.b16 %v526, %v522
    %v739 = vpack.c.b16 %v527, %v523
    %v740 = vpack.c.b16 %v532, %v528
    %v741 = vpack.c.b16 %v533, %v529
    %v742 = vpack.c.b16 %v534, %v530
    %v743 = vpack.c.b16 %v535, %v531
    %v744 = vpack.c.b16 %v540, %v536
    %v745 = vpack.c.b16 %v541, %v537
    %v746 = vpack.c.b16 %v542, %v538
    %v747 = vpack.c.b16 %v543, %v539
    %v748 = vpack.c.b16 %v548, %v544
    %v749 = vpack.c.b16 %v549, %v545
    %v750 = vpack.c.b16 %v550, %v546
    %v751 = vpack.c.b16 %v551, %v547
    %v752 = vpack.c.b16 %v556, %v552
    %v753 = vpack.c.b16 %v557, %v553
    %v754 = vpack.c.b16 %v558, %v554
    %v755 = vpack.c.b16 %v559, %v555
    %v756 = vpack.c.b16 %v564, %v560
    %v757 = vpack.c.b16 %v565, %v561
    %v758 = vpack.c.b16 %v566, %v562
    %v759 = vpack.c.b16 %v567, %v563
    %v760 = vpack.c.b16 %v572, %v568
    %v761 = vpack.c.b16 %v573, %v569
    %v762 = vpack.c.b16 %v574, %v570
    %v763 = vpack.c.b16 %v575, %v571
    %v764 = vpack.c.b16 %v580, %v576
    %v765 = vpack.c.b16 %v581, %v577
    %v766 = vpack.c.b16 %v582, %v578
    %v767 = vpack.c.b16 %v583, %v579
    %v768 = vpack.c.b16 %v588, %v584
    %v769 = vpack.c.b16 %v589, %v585
    %v770 = vpack.c.b16 %v590, %v586
    %v771 = vpack.c.b16 %v591, %v587
    %v772 = vpack.c.b16 %v596, %v592
    %v773 = vpack.c.b16 %v597, %v593
    %v774 = vpack.c.b16 %v598, %v594
    %v775 = vpack.c.b16 %v599, %v595
    %v776 = vpack.c.b16 %v604, %v600
    %v777 = vpack.c.b16 %v605, %v601
    %v778 = vpack.c.b16 %v606, %v602
    %v779 = vpack.c.b16 %v607, %v603
    %v780 = vpack.c.b16 %v612, %v608
    %v781 = vpack.c.b16 %v613, %v609
    %v782 = vpack.c.b16 %v614, %v610
    %v783 = vpack.c.b16 %v615, %v611
    %v784 = vpack.c.b16 %v620, %v616
    %v785 = vpack.c.b16 %v621, %v617
    %v786 = vpack.c.b16 %v622, %v618
    %v787 = vpack.c.b16 %v623, %v619
    %v788 = vpack.c.b16 %v628, %v624
    %v789 = vpack.c.b16 %v629, %v625
    %v790 = vpack.c.b16 %v630, %v626
    %v791 = vpack.c.b16 %v631, %v627
    %v792 = vpack.c.b16 %v636, %v632
    %v793 = vpack.c.b16 %v637, %v633
    %v794 = vpack.c.b16 %v638, %v634
    %v795 = vpack.c.b16 %v639, %v635
    %v796 = vpack.c.b16 %v644, %v640
    %v797 = vpack.c.b16 %v645, %v641
    %v798 = vpack.c.b16 %v646, %v642
    %v799 = vpack.c.b16 %v647, %v643
    %v800 = vpack.c.b16 %v652, %v648
    %v801 = vpack.c.b16 %v653, %v649
    %v802 = vpack.c.b16 %v654, %v650
    %v803 = vpack.c.b16 %v655, %v651
    %v804 = vpack.c.b16 %v660, %v656
    %v805 = vpack.c.b16 %v661, %v657
    %v806 = vpack.c.b16 %v662, %v658
    %v807 = vpack.c.b16 %v663, %v659
    %v808 = vpack.c.b16 %v668, %v664
    %v809 = vpack.c.b16 %v669, %v665
    %v810 = vpack.c.b16 %v670, %v666
    %v811 = vpack.c.b16 %v671, %v667
    %v812 = vpack.c.b16 %v676, %v672
    %v813 = vpack.c.b16 %v677, %v673
    %v814 = vpack.c.b16 %v678, %v674
    %v815 = vpack.c.b16 %v679, %v675
    %v816 = vpack.c.b16 %v684, %v680
    %v817 = vpack.c.b16 %v685, %v681
    %v818 = vpack.c.b16 %v686, %v682
    %v819 = vpack.c.b16 %v687, %v683
    %v820 = vpack.c.b16 %v692, %v688
    %v821 = vpack.c.b16 %v693, %v689
    %v822 = vpack.c.b16 %v694, %v690
    %v823 = vpack.c.b16 %v695, %v691
    %952 = vmatprep.subr.bf16.mxu0 %v697
    %953 = vmatpush1.bf16.msra.mxu0 %v696
    %954 = vmatprep.subr.bf16.mxu0 %v701
    %955 = vmatpush1.bf16.msra.mxu0 %v700
    %956 = vmatprep.subr.bf16.mxu0 %v705
    %957 = vmatpush1.bf16.msra.mxu0 %v704
    %958 = vmatprep.subr.bf16.mxu0 %v709
    %959 = vmatpush1.bf16.msra.mxu0 %v708
    %960 = vmatprep.subr.bf16.mxu0 %v713
    %961 = vmatpush1.bf16.msra.mxu0 %v712
    %962 = vmatprep.subr.bf16.mxu0 %v717
    %963 = vmatpush1.bf16.msra.mxu0 %v716
    %964 = vmatprep.subr.bf16.mxu0 %v721
    %965 = vmatpush1.bf16.msra.mxu0 %v720
    %966 = vmatprep.subr.bf16.mxu0 %v725
    %967 = vmatpush1.bf16.msra.mxu0 %v724
    %968 = vmatprep.subr.bf16.mxu0 %v729
    %969 = vmatpush1.bf16.msra.mxu0 %v728
    %970 = vmatprep.subr.bf16.mxu0 %v733
    %971 = vmatpush1.bf16.msra.mxu0 %v732
    %972 = vmatprep.subr.bf16.mxu0 %v737
    %973 = vmatpush1.bf16.msra.mxu0 %v736
    %974 = vmatprep.subr.bf16.mxu0 %v741
    %975 = vmatpush1.bf16.msra.mxu0 %v740
    %976 = vmatprep.subr.bf16.mxu0 %v745
    %977 = vmatpush1.bf16.msra.mxu0 %v744
    %978 = vmatprep.subr.bf16.mxu0 %v749
    %979 = vmatpush1.bf16.msra.mxu0 %v748
    %980 = vmatprep.subr.bf16.mxu0 %v753
    %981 = vmatpush1.bf16.msra.mxu0 %v752
    %982 = vmatprep.subr.bf16.mxu0 %v757
    %983 = vmatpush1.bf16.msra.mxu0 %v756
    %984 = vmatprep.mubr.bf16.mxu0 %v281
    %985 = vmatmul.mubr.bf16.gmra.mrb[0].mxu0 %v280
    %v986 = vpop.f32.mrb[0].mxu0
    %v987 = vadd.f32 0.0, %v986
    %v988 = vpop.f32.mrb[0].mxu0
    %v989 = vadd.f32 0.0, %v988
    %v990 = vpop.f32.mrb[0].mxu0
    %v991 = vadd.f32 0.0, %v990
    %v992 = vpop.f32.mrb[0].mxu0
    %v993 = vadd.f32 0.0, %v992
    %994 = vmatprep.mubr.bf16.mxu0 %v285
    %995 = vmatmul.mubr.bf16.gmra.mrb[0].mxu0 %v284
    %v996 = vpop.f32.mrb[0].mxu0
    %v997 = vadd.f32 0.0, %v996
    %v998 = vpop.f32.mrb[0].mxu0
    %v999 = vadd.f32 0.0, %v998
    %v1000 = vpop.f32.mrb[0].mxu0
    %v1001 = vadd.f32 0.0, %v1000
    %v1002 = vpop.f32.mrb[0].mxu0
    %v1003 = vadd.f32 0.0, %v1002
    %1004 = vmatprep.mubr.bf16.mxu0 %v289
    %1005 = vmatmul.mubr.bf16.gmra.mrb[0].mxu0 %v288
    %v1006 = vpop.f32.mrb[0].mxu0
    %v1007 = vadd.f32 0.0, %v1006
    %v1008 = vpop.f32.mrb[0].mxu0
    %v1009 = vadd.f32 0.0, %v1008
    %v1010 = vpop.f32.mrb[0].mxu0
    %v1011 = vadd.f32 0.0, %v1010
    %v1012 = vpop.f32.mrb[0].mxu0
    %v1013 = vadd.f32 0.0, %v1012
    %1014 = vmatprep.mubr.bf16.mxu0 %v293
    %1015 = vmatmul.mubr.bf16.gmra.mrb[0].mxu0 %v292
    %v1016 = vpop.f32.mrb[0].mxu0
    %v1017 = vadd.f32 0.0, %v1016
    %v1018 = vpop.f32.mrb[0].mxu0
    %v1019 = vadd.f32 0.0, %v1018
    %v1020 = vpop.f32.mrb[0].mxu0
    %v1021 = vadd.f32 0.0, %v1020
    %v1022 = vpop.f32.mrb[0].mxu0
    %v1023 = vadd.f32 0.0, %v1022
    %1024 = vdwg.mxu0
    %1025 = vmatprep.subr.bf16.mxu0 %v761
    %1026 = vmatpush1.bf16.msra.mxu0 %v760
    %1027 = vmatprep.subr.bf16.mxu0 %v765
    %1028 = vmatpush1.bf16.msra.mxu0 %v764
    %1029 = vmatprep.subr.bf16.mxu0 %v769
    %1030 = vmatpush1.bf16.msra.mxu0 %v768
    %1031 = vmatprep.subr.bf16.mxu0 %v773
    %1032 = vmatpush1.bf16.msra.mxu0 %v772
    %1033 = vmatprep.subr.bf16.mxu0 %v777
    %1034 = vmatpush1.bf16.msra.mxu0 %v776
    %1035 = vmatprep.subr.bf16.mxu0 %v781
    %1036 = vmatpush1.bf16.msra.mxu0 %v780
    %1037 = vmatprep.subr.bf16.mxu0 %v785
    %1038 = vmatpush1.bf16.msra.mxu0 %v784
    %1039 = vmatprep.subr.bf16.mxu0 %v789
    %1040 = vmatpush1.bf16.msra.mxu0 %v788
    %1041 = vmatprep.subr.bf16.mxu0 %v793
    %1042 = vmatpush1.bf16.msra.mxu0 %v792
    %1043 = vmatprep.subr.bf16.mxu0 %v797
    %1044 = vmatpush1.bf16.msra.mxu0 %v796
    %1045 = vmatprep.subr.bf16.mxu0 %v801
    %1046 = vmatpush1.bf16.msra.mxu0 %v800
    %1047 = vmatprep.subr.bf16.mxu0 %v805
    %1048 = vmatpush1.bf16.msra.mxu0 %v804
    %1049 = vmatprep.subr.bf16.mxu0 %v809
    %1050 = vmatpush1.bf16.msra.mxu0 %v808
    %1051 = vmatprep.subr.bf16.mxu0 %v813
    %1052 = vmatpush1.bf16.msra.mxu0 %v812
    %1053 = vmatprep.subr.bf16.mxu0 %v817
    %1054 = vmatpush1.bf16.msra.mxu0 %v816
    %1055 = vmatprep.subr.bf16.mxu0 %v821
    %1056 = vmatpush1.bf16.msra.mxu0 %v820
    %1057 = vmatprep.mubr.bf16.mxu0 %v283
    %1058 = vmatmul.mubr.bf16.gmra.mrb[0].mxu0 %v282
    %v1059 = vpop.f32.mrb[0].mxu0
    %v1060 = vadd.f32 %v987, %v1059
    %v1061 = vpop.f32.mrb[0].mxu0
    %v1062 = vadd.f32 %v989, %v1061
    %v1063 = vpop.f32.mrb[0].mxu0
    %v1064 = vadd.f32 %v991, %v1063
    %v1065 = vpop.f32.mrb[0].mxu0
    %v1066 = vadd.f32 %v993, %v1065
    %1067 = vmatprep.mubr.bf16.mxu0 %v287
    %1068 = vmatmul.mubr.bf16.gmra.mrb[0].mxu0 %v286
    %v1069 = vpop.f32.mrb[0].mxu0
    %v1070 = vadd.f32 %v997, %v1069
    %v1071 = vpop.f32.mrb[0].mxu0
    %v1072 = vadd.f32 %v999, %v1071
    %v1073 = vpop.f32.mrb[0].mxu0
    %v1074 = vadd.f32 %v1001, %v1073
    %v1075 = vpop.f32.mrb[0].mxu0
    %v1076 = vadd.f32 %v1003, %v1075
    %1077 = vmatprep.mubr.bf16.mxu0 %v291
    %1078 = vmatmul.mubr.bf16.gmra.mrb[0].mxu0 %v290
    %v1079 = vpop.f32.mrb[0].mxu0
    %v1080 = vadd.f32 %v1007, %v1079
    %v1081 = vpop.f32.mrb[0].mxu0
    %v1082 = vadd.f32 %v1009, %v1081
    %v1083 = vpop.f32.mrb[0].mxu0
    %v1084 = vadd.f32 %v1011, %v1083
    %v1085 = vpop.f32.mrb[0].mxu0
    %v1086 = vadd.f32 %v1013, %v1085
    %1087 = vmatprep.mubr.bf16.mxu0 %v295
    %1088 = vmatmul.mubr.bf16.gmra.mrb[0].mxu0 %v294
    %v1089 = vpop.f32.mrb[0].mxu0
    %v1090 = vadd.f32 %v1017, %v1089
    %v1091 = vpop.f32.mrb[0].mxu0
    %v1092 = vadd.f32 %v1019, %v1091
    %v1093 = vpop.f32.mrb[0].mxu0
    %v1094 = vadd.f32 %v1021, %v1093
    %v1095 = vpop.f32.mrb[0].mxu0
    %v1096 = vadd.f32 %v1023, %v1095
    %1097 = vdwg.mxu0
    %1098 = vmatprep.subr.bf16.mxu0 %v699
    %1099 = vmatpush1.bf16.msra.mxu0 %v698
    %1100 = vmatprep.subr.bf16.mxu0 %v703
    %1101 = vmatpush1.bf16.msra.mxu0 %v702
    %1102 = vmatprep.subr.bf16.mxu0 %v707
    %1103 = vmatpush1.bf16.msra.mxu0 %v706
    %1104 = vmatprep.subr.bf16.mxu0 %v711
    %1105 = vmatpush1.bf16.msra.mxu0 %v710
    %1106 = vmatprep.subr.bf16.mxu0 %v715
    %1107 = vmatpush1.bf16.msra.mxu0 %v714
    %1108 = vmatprep.subr.bf16.mxu0 %v719
    %1109 = vmatpush1.bf16.msra.mxu0 %v718
    %1110 = vmatprep.subr.bf16.mxu0 %v723
    %1111 = vmatpush1.bf16.msra.mxu0 %v722
    %1112 = vmatprep.subr.bf16.mxu0 %v727
    %1113 = vmatpush1.bf16.msra.mxu0 %v726
    %1114 = vmatprep.subr.bf16.mxu0 %v731
    %1115 = vmatpush1.bf16.msra.mxu0 %v730
    %1116 = vmatprep.subr.bf16.mxu0 %v735
    %1117 = vmatpush1.bf16.msra.mxu0 %v734
    %1118 = vmatprep.subr.bf16.mxu0 %v739
    %1119 = vmatpush1.bf16.msra.mxu0 %v738
    %1120 = vmatprep.subr.bf16.mxu0 %v743
    %1121 = vmatpush1.bf16.msra.mxu0 %v742
    %1122 = vmatprep.subr.bf16.mxu0 %v747
    %1123 = vmatpush1.bf16.msra.mxu0 %v746
    %1124 = vmatprep.subr.bf16.mxu0 %v751
    %1125 = vmatpush1.bf16.msra.mxu0 %v750
    %1126 = vmatprep.subr.bf16.mxu0 %v755
    %1127 = vmatpush1.bf16.msra.mxu0 %v754
    %1128 = vmatprep.subr.bf16.mxu0 %v759
    %1129 = vmatpush1.bf16.msra.mxu0 %v758
    %1130 = vmatprep.mubr.bf16.mxu0 %v281
    %1131 = vmatmul.mubr.bf16.gmra.mrb[0].mxu0 %v280
    %v1132 = vpop.f32.mrb[0].mxu0
    %v1133 = vadd.f32 0.0, %v1132
    %v1134 = vpop.f32.mrb[0].mxu0
    %v1135 = vadd.f32 0.0, %v1134
    %v1136 = vpop.f32.mrb[0].mxu0
    %v1137 = vadd.f32 0.0, %v1136
    %v1138 = vpop.f32.mrb[0].mxu0
    %v1139 = vadd.f32 0.0, %v1138
    %1140 = vmatprep.mubr.bf16.mxu0 %v285
    %1141 = vmatmul.mubr.bf16.gmra.mrb[0].mxu0 %v284
    %v1142 = vpop.f32.mrb[0].mxu0
    %v1143 = vadd.f32 0.0, %v1142
    %v1144 = vpop.f32.mrb[0].mxu0
    %v1145 = vadd.f32 0.0, %v1144
    %v1146 = vpop.f32.mrb[0].mxu0
    %v1147 = vadd.f32 0.0, %v1146
    %v1148 = vpop.f32.mrb[0].mxu0
    %v1149 = vadd.f32 0.0, %v1148
    %1150 = vmatprep.mubr.bf16.mxu0 %v289
    %1151 = vmatmul.mubr.bf16.gmra.mrb[0].mxu0 %v288
    %v1152 = vpop.f32.mrb[0].mxu0
    %v1153 = vadd.f32 0.0, %v1152
    %v1154 = vpop.f32.mrb[0].mxu0
    %v1155 = vadd.f32 0.0, %v1154
    %v1156 = vpop.f32.mrb[0].mxu0
    %v1157 = vadd.f32 0.0, %v1156
    %v1158 = vpop.f32.mrb[0].mxu0
    %v1159 = vadd.f32 0.0, %v1158
    %1160 = vmatprep.mubr.bf16.mxu0 %v293
    %1161 = vmatmul.mubr.bf16.gmra.mrb[0].mxu0 %v292
    %v1162 = vpop.f32.mrb[0].mxu0
    %v1163 = vadd.f32 0.0, %v1162
    %v1164 = vpop.f32.mrb[0].mxu0
    %v1165 = vadd.f32 0.0, %v1164
    %v1166 = vpop.f32.mrb[0].mxu0
    %v1167 = vadd.f32 0.0, %v1166
    %v1168 = vpop.f32.mrb[0].mxu0
    %v1169 = vadd.f32 0.0, %v1168
    %1170 = vdwg.mxu0
    %1171 = vmatprep.subr.bf16.mxu0 %v763
    %1172 = vmatpush1.bf16.msra.mxu0 %v762
    %1173 = vmatprep.subr.bf16.mxu0 %v767
    %1174 = vmatpush1.bf16.msra.mxu0 %v766
    %1175 = vmatprep.subr.bf16.mxu0 %v771
    %1176 = vmatpush1.bf16.msra.mxu0 %v770
    %1177 = vmatprep.subr.bf16.mxu0 %v775
    %1178 = vmatpush1.bf16.msra.mxu0 %v774
    %1179 = vmatprep.subr.bf16.mxu0 %v779
    %1180 = vmatpush1.bf16.msra.mxu0 %v778
    %1181 = vmatprep.subr.bf16.mxu0 %v783
    %1182 = vmatpush1.bf16.msra.mxu0 %v782
    %1183 = vmatprep.subr.bf16.mxu0 %v787
    %1184 = vmatpush1.bf16.msra.mxu0 %v786
    %1185 = vmatprep.subr.bf16.mxu0 %v791
    %1186 = vmatpush1.bf16.msra.mxu0 %v790
    %1187 = vmatprep.subr.bf16.mxu0 %v795
    %1188 = vmatpush1.bf16.msra.mxu0 %v794
    %1189 = vmatprep.subr.bf16.mxu0 %v799
    %1190 = vmatpush1.bf16.msra.mxu0 %v798
    %1191 = vmatprep.subr.bf16.mxu0 %v803
    %1192 = vmatpush1.bf16.msra.mxu0 %v802
    %1193 = vmatprep.subr.bf16.mxu0 %v807
    %1194 = vmatpush1.bf16.msra.mxu0 %v806
    %1195 = vmatprep.subr.bf16.mxu0 %v811
    %1196 = vmatpush1.bf16.msra.mxu0 %v810
    %1197 = vmatprep.subr.bf16.mxu0 %v815
    %1198 = vmatpush1.bf16.msra.mxu0 %v814
    %1199 = vmatprep.subr.bf16.mxu0 %v819
    %1200 = vmatpush1.bf16.msra.mxu0 %v818
    %1201 = vmatprep.subr.bf16.mxu0 %v823
    %1202 = vmatpush1.bf16.msra.mxu0 %v822
    %1203 = vmatprep.mubr.bf16.mxu0 %v283
    %1204 = vmatmul.mubr.bf16.gmra.mrb[0].mxu0 %v282
    %v1205 = vpop.f32.mrb[0].mxu0
    %v1206 = vadd.f32 %v1133, %v1205
    %v1207 = vpop.f32.mrb[0].mxu0
    %v1208 = vadd.f32 %v1135, %v1207
    %v1209 = vpop.f32.mrb[0].mxu0
    %v1210 = vadd.f32 %v1137, %v1209
    %v1211 = vpop.f32.mrb[0].mxu0
    %v1212 = vadd.f32 %v1139, %v1211
    %1213 = vmatprep.mubr.bf16.mxu0 %v287
    %1214 = vmatmul.mubr.bf16.gmra.mrb[0].mxu0 %v286
    %v1215 = vpop.f32.mrb[0].mxu0
    %v1216 = vadd.f32 %v1143, %v1215
    %v1217 = vpop.f32.mrb[0].mxu0
    %v1218 = vadd.f32 %v1145, %v1217
    %v1219 = vpop.f32.mrb[0].mxu0
    %v1220 = vadd.f32 %v1147, %v1219
    %v1221 = vpop.f32.mrb[0].mxu0
    %v1222 = vadd.f32 %v1149, %v1221
    %1223 = vmatprep.mubr.bf16.mxu0 %v291
    %1224 = vmatmul.mubr.bf16.gmra.mrb[0].mxu0 %v290
    %v1225 = vpop.f32.mrb[0].mxu0
    %v1226 = vadd.f32 %v1153, %v1225
    %v1227 = vpop.f32.mrb[0].mxu0
    %v1228 = vadd.f32 %v1155, %v1227
    %v1229 = vpop.f32.mrb[0].mxu0
    %v1230 = vadd.f32 %v1157, %v1229
    %v1231 = vpop.f32.mrb[0].mxu0
    %v1232 = vadd.f32 %v1159, %v1231
    %1233 = vmatprep.mubr.bf16.mxu0 %v295
    %1234 = vmatmul.mubr.bf16.gmra.mrb[0].mxu0 %v294
    %v1235 = vpop.f32.mrb[0].mxu0
    %v1236 = vadd.f32 %v1163, %v1235
    %v1237 = vpop.f32.mrb[0].mxu0
    %v1238 = vadd.f32 %v1165, %v1237
    %v1239 = vpop.f32.mrb[0].mxu0
    %v1240 = vadd.f32 %v1167, %v1239
    %v1241 = vpop.f32.mrb[0].mxu0
    %v1242 = vadd.f32 %v1169, %v1241
    %1243 = vdwg.mxu0
    %v1244 = vadd.f32 %v1060, %v1064
    %v1245 = vadd.f32 %v1244, %v1070
    %v1246 = vadd.f32 %v1245, %v1074
    %v1247 = vadd.f32 %v1246, %v1080
    %v1248 = vadd.f32 %v1247, %v1084
    %v1249 = vadd.f32 %v1248, %v1090
    %v1250 = vadd.f32 %v1249, %v1094
    %v1251 = vrot.slane %v1250, 4
    %v1252 = vadd.f32 %v1250, %v1251
    %v1253 = vrot.slane %v1252, 2
    %v1254 = vadd.f32 %v1252, %v1253
    %v1255 = vrot.slane %v1254, 1
    %v1256 = vadd.f32 %v1254, %v1255
    %v1257 = vadd.f32 %v1062, %v1066
    %v1258 = vadd.f32 %v1257, %v1072
    %v1259 = vadd.f32 %v1258, %v1076
    %v1260 = vadd.f32 %v1259, %v1082
    %v1261 = vadd.f32 %v1260, %v1086
    %v1262 = vadd.f32 %v1261, %v1092
    %v1263 = vadd.f32 %v1262, %v1096
    %v1264 = vrot.slane %v1263, 4
    %v1265 = vadd.f32 %v1263, %v1264
    %v1266 = vrot.slane %v1265, 2
    %v1267 = vadd.f32 %v1265, %v1266
    %v1268 = vrot.slane %v1267, 1
    %v1269 = vadd.f32 %v1267, %v1268
    %v1270 = vadd.f32 %v1206, %v1210
    %v1271 = vadd.f32 %v1270, %v1216
    %v1272 = vadd.f32 %v1271, %v1220
    %v1273 = vadd.f32 %v1272, %v1226
    %v1274 = vadd.f32 %v1273, %v1230
    %v1275 = vadd.f32 %v1274, %v1236
    %v1276 = vadd.f32 %v1275, %v1240
    %v1277 = vrot.slane %v1276, 4
    %v1278 = vadd.f32 %v1276, %v1277
    %v1279 = vrot.slane %v1278, 2
    %v1280 = vadd.f32 %v1278, %v1279
    %v1281 = vrot.slane %v1280, 1
    %v1282 = vadd.f32 %v1280, %v1281
    %v1283 = vadd.f32 %v1208, %v1212
    %v1284 = vadd.f32 %v1283, %v1218
    %v1285 = vadd.f32 %v1284, %v1222
    %v1286 = vadd.f32 %v1285, %v1228
    %v1287 = vadd.f32 %v1286, %v1232
    %v1288 = vadd.f32 %v1287, %v1238
    %v1289 = vadd.f32 %v1288, %v1242
    %v1290 = vrot.slane %v1289, 4
    %v1291 = vadd.f32 %v1289, %v1290
    %v1292 = vrot.slane %v1291, 2
    %v1293 = vadd.f32 %v1291, %v1292
    %v1294 = vrot.slane %v1293, 1
    %v1295 = vadd.f32 %v1293, %v1294
    %v1296 = vmul.f32 %v1256, 0.015625
    %v1297 = vmul.f32 %v1269, 0.015625
    %v1298 = vmul.f32 %v1282, 0.015625
    %v1299 = vmul.f32 %v1295, 0.015625
    %v1300 = vmul.f32 %v1060, %v1060
    %v1301 = vmul.f32 %v1062, %v1062
    %v1302 = vmul.f32 %v1206, %v1206
    %v1303 = vmul.f32 %v1208, %v1208
    %v1304 = vmul.f32 %v1064, %v1064
    %v1305 = vmul.f32 %v1066, %v1066
    %v1306 = vmul.f32 %v1210, %v1210
    %v1307 = vmul.f32 %v1212, %v1212
    %v1308 = vmul.f32 %v1070, %v1070
    %v1309 = vmul.f32 %v1072, %v1072
    %v1310 = vmul.f32 %v1216, %v1216
    %v1311 = vmul.f32 %v1218, %v1218
    %v1312 = vmul.f32 %v1074, %v1074
    %v1313 = vmul.f32 %v1076, %v1076
    %v1314 = vmul.f32 %v1220, %v1220
    %v1315 = vmul.f32 %v1222, %v1222
    %v1316 = vmul.f32 %v1080, %v1080
    %v1317 = vmul.f32 %v1082, %v1082
    %v1318 = vmul.f32 %v1226, %v1226
    %v1319 = vmul.f32 %v1228, %v1228
    %v1320 = vmul.f32 %v1084, %v1084
    %v1321 = vmul.f32 %v1086, %v1086
    %v1322 = vmul.f32 %v1230, %v1230
    %v1323 = vmul.f32 %v1232, %v1232
    %v1324 = vmul.f32 %v1090, %v1090
    %v1325 = vmul.f32 %v1092, %v1092
    %v1326 = vmul.f32 %v1236, %v1236
    %v1327 = vmul.f32 %v1238, %v1238
    %v1328 = vmul.f32 %v1094, %v1094
    %v1329 = vmul.f32 %v1096, %v1096
    %v1330 = vmul.f32 %v1240, %v1240
    %v1331 = vmul.f32 %v1242, %v1242
    %v1332 = vadd.f32 %v1300, %v1304
    %v1333 = vadd.f32 %v1332, %v1308
    %v1334 = vadd.f32 %v1333, %v1312
    %v1335 = vadd.f32 %v1334, %v1316
    %v1336 = vadd.f32 %v1335, %v1320
    %v1337 = vadd.f32 %v1336, %v1324
    %v1338 = vadd.f32 %v1337, %v1328
    %v1339 = vrot.slane %v1338, 4
    %v1340 = vadd.f32 %v1338, %v1339
    %v1341 = vrot.slane %v1340, 2
    %v1342 = vadd.f32 %v1340, %v1341
    %v1343 = vrot.slane %v1342, 1
    %v1344 = vadd.f32 %v1342, %v1343
    %v1345 = vadd.f32 %v1301, %v1305
    %v1346 = vadd.f32 %v1345, %v1309
    %v1347 = vadd.f32 %v1346, %v1313
    %v1348 = vadd.f32 %v1347, %v1317
    %v1349 = vadd.f32 %v1348, %v1321
    %v1350 = vadd.f32 %v1349, %v1325
    %v1351 = vadd.f32 %v1350, %v1329
    %v1352 = vrot.slane %v1351, 4
    %v1353 = vadd.f32 %v1351, %v1352
    %v1354 = vrot.slane %v1353, 2
    %v1355 = vadd.f32 %v1353, %v1354
    %v1356 = vrot.slane %v1355, 1
    %v1357 = vadd.f32 %v1355, %v1356
    %v1358 = vadd.f32 %v1302, %v1306
    %v1359 = vadd.f32 %v1358, %v1310
    %v1360 = vadd.f32 %v1359, %v1314
    %v1361 = vadd.f32 %v1360, %v1318
    %v1362 = vadd.f32 %v1361, %v1322
    %v1363 = vadd.f32 %v1362, %v1326
    %v1364 = vadd.f32 %v1363, %v1330
    %v1365 = vrot.slane %v1364, 4
    %v1366 = vadd.f32 %v1364, %v1365
    %v1367 = vrot.slane %v1366, 2
    %v1368 = vadd.f32 %v1366, %v1367
    %v1369 = vrot.slane %v1368, 1
    %v1370 = vadd.f32 %v1368, %v1369
    %v1371 = vadd.f32 %v1303, %v1307
    %v1372 = vadd.f32 %v1371, %v1311
    %v1373 = vadd.f32 %v1372, %v1315
    %v1374 = vadd.f32 %v1373, %v1319
    %v1375 = vadd.f32 %v1374, %v1323
    %v1376 = vadd.f32 %v1375, %v1327
    %v1377 = vadd.f32 %v1376, %v1331
    %v1378 = vrot.slane %v1377, 4
    %v1379 = vadd.f32 %v1377, %v1378
    %v1380 = vrot.slane %v1379, 2
    %v1381 = vadd.f32 %v1379, %v1380
    %v1382 = vrot.slane %v1381, 1
    %v1383 = vadd.f32 %v1381, %v1382
    %v1384 = vmul.f32 %v1344, 0.015625
    %v1385 = vmul.f32 %v1357, 0.015625
    %v1386 = vmul.f32 %v1370, 0.015625
    %v1387 = vmul.f32 %v1383, 0.015625
    %v1388 = vmul.f32 %v1296, %v1296
    %v1389 = vmul.f32 %v1297, %v1297
    %v1390 = vmul.f32 %v1298, %v1298
    %v1391 = vmul.f32 %v1299, %v1299
    %v1392 = vsub.f32 %v1384, %v1388
    %v1393 = vsub.f32 %v1385, %v1389
    %v1394 = vsub.f32 %v1386, %v1390
    %v1395 = vsub.f32 %v1387, %v1391
    %v1396 = vmax.f32 %v1392, 0.0
    %v1397 = vmax.f32 %v1393, 0.0
    %v1398 = vmax.f32 %v1394, 0.0
    %v1399 = vmax.f32 %v1395, 0.0
    %v1400 = vld [vmem:[%s2] sm:$0xf]
    %v1401 = vadd.f32 %v1396, 1e-05
    %v1402 = vadd.f32 %v1397, 1e-05
    %v1403 = vadd.f32 %v1398, 1e-05
    %v1404 = vadd.f32 %v1399, 1e-05
    %v1405 = vrsqrt.pop %v1401
    %v1406 = vrsqrt.pop %v1402
    %v1407 = vrsqrt.pop %v1403
    %v1408 = vrsqrt.pop %v1404
    %v1413 = vcombine.low %v1405, %v1406
    %v1414 = vcombine.low %v1407, %v1408
    %v1416 = vunpack.c.l.s4 1966171168
    %v1417 = vunpack.c.0.s8 %v1416
    %v1418 = vlaneseq
    %v1419 = vshrl.u32 %v1418, 7
    %v1420 = vsub.s32 %v1417, %v1419
    %v1421 = vrot.slane %v1413, %v1420
    %v1423 = vunpack.c.l.s4 1966171168
    %v1424 = vunpack.c.0.s8 %v1423
    %v1425 = vlaneseq
    %v1426 = vshrl.u32 %v1425, 7
    %v1427 = vsub.s32 %v1424, %v1426
    %v1428 = vrot.slane %v1414, %v1427
    %v1429 = vcombine.low %v1421, %v1428
    %v1431 = vunpack.c.l.s4 1966171168
    %v1432 = vunpack.c.0.s8 %v1431
    %v1433 = vlaneseq
    %v1434 = vshrl.u32 %v1433, 7
    %v1435 = vsub.s32 %v1432, %v1434
    %v1436 = vrot.slane %v1429, %v1435
    %v1438 = vmul.f32 %v1400, %v1436
    %v1439 = vld [vmem:[%s3] sm:$0xf]
    %v1441 = vlaneseq
    %v1442 = vshrl.u32 %v1441, 7
    %v1443 = vsub.s32 0, %v1442
    %v1444 = vrot.slane %v1438, %v1443
    %v1445 = vlaneseq
    %v1446 = vshrl.u32 %v1445, 7
    %v1447 = vsub.s32 1, %v1446
    %v1448 = vrot.slane %v1438, %v1447
    %v1449 = vlaneseq
    %v1450 = vshrl.u32 %v1449, 7
    %v1451 = vsub.s32 2, %v1450
    %v1452 = vrot.slane %v1438, %v1451
    %v1453 = vlaneseq
    %v1454 = vshrl.u32 %v1453, 7
    %v1455 = vsub.s32 3, %v1454
    %v1456 = vrot.slane %v1438, %v1455
    %v1461 = vmul.f32 %v1296, %v1444
    %v1462 = vmul.f32 %v1297, %v1448
    %v1463 = vmul.f32 %v1298, %v1452
    %v1464 = vmul.f32 %v1299, %v1456
    %v1469 = vcombine.low %v1461, %v1462
    %v1470 = vcombine.low %v1463, %v1464
    %v1472 = vunpack.c.l.s4 1966171168
    %v1473 = vunpack.c.0.s8 %v1472
    %v1474 = vlaneseq
    %v1475 = vshrl.u32 %v1474, 7
    %v1476 = vsub.s32 %v1473, %v1475
    %v1477 = vrot.slane %v1469, %v1476
    %v1479 = vunpack.c.l.s4 1966171168
    %v1480 = vunpack.c.0.s8 %v1479
    %v1481 = vlaneseq
    %v1482 = vshrl.u32 %v1481, 7
    %v1483 = vsub.s32 %v1480, %v1482
    %v1484 = vrot.slane %v1470, %v1483
    %v1485 = vcombine.low %v1477, %v1484
    %v1487 = vunpack.c.l.s4 1966171168
    %v1488 = vunpack.c.0.s8 %v1487
    %v1489 = vlaneseq
    %v1490 = vshrl.u32 %v1489, 7
    %v1491 = vsub.s32 %v1488, %v1490
    %v1492 = vrot.slane %v1485, %v1491
    %v1494 = vsub.f32 %v1439, %v1492
    %v1495 = vmul.f32 %v1060, %v1444
    %v1496 = vmul.f32 %v1062, %v1448
    %v1497 = vmul.f32 %v1206, %v1452
    %v1498 = vmul.f32 %v1208, %v1456
    %v1499 = vmul.f32 %v1064, %v1444
    %v1500 = vmul.f32 %v1066, %v1448
    %v1501 = vmul.f32 %v1210, %v1452
    %v1502 = vmul.f32 %v1212, %v1456
    %v1503 = vmul.f32 %v1070, %v1444
    %v1504 = vmul.f32 %v1072, %v1448
    %v1505 = vmul.f32 %v1216, %v1452
    %v1506 = vmul.f32 %v1218, %v1456
    %v1507 = vmul.f32 %v1074, %v1444
    %v1508 = vmul.f32 %v1076, %v1448
    %v1509 = vmul.f32 %v1220, %v1452
    %v1510 = vmul.f32 %v1222, %v1456
    %v1511 = vmul.f32 %v1080, %v1444
    %v1512 = vmul.f32 %v1082, %v1448
    %v1513 = vmul.f32 %v1226, %v1452
    %v1514 = vmul.f32 %v1228, %v1456
    %v1515 = vmul.f32 %v1084, %v1444
    %v1516 = vmul.f32 %v1086, %v1448
    %v1517 = vmul.f32 %v1230, %v1452
    %v1518 = vmul.f32 %v1232, %v1456
    %v1519 = vmul.f32 %v1090, %v1444
    %v1520 = vmul.f32 %v1092, %v1448
    %v1521 = vmul.f32 %v1236, %v1452
    %v1522 = vmul.f32 %v1238, %v1456
    %v1523 = vmul.f32 %v1094, %v1444
    %v1524 = vmul.f32 %v1096, %v1448
    %v1525 = vmul.f32 %v1240, %v1452
    %v1526 = vmul.f32 %v1242, %v1456
    %v1528 = vlaneseq
    %v1529 = vshrl.u32 %v1528, 7
    %v1530 = vsub.s32 0, %v1529
    %v1531 = vrot.slane %v1494, %v1530
    %v1532 = vlaneseq
    %v1533 = vshrl.u32 %v1532, 7
    %v1534 = vsub.s32 1, %v1533
    %v1535 = vrot.slane %v1494, %v1534
    %v1536 = vlaneseq
    %v1537 = vshrl.u32 %v1536, 7
    %v1538 = vsub.s32 2, %v1537
    %v1539 = vrot.slane %v1494, %v1538
    %v1540 = vlaneseq
    %v1541 = vshrl.u32 %v1540, 7
    %v1542 = vsub.s32 3, %v1541
    %v1543 = vrot.slane %v1494, %v1542
    %v1548 = vadd.f32 %v1495, %v1531
    %v1549 = vadd.f32 %v1496, %v1535
    %v1550 = vadd.f32 %v1497, %v1539
    %v1551 = vadd.f32 %v1498, %v1543
    %v1552 = vadd.f32 %v1499, %v1531
    %v1553 = vadd.f32 %v1500, %v1535
    %v1554 = vadd.f32 %v1501, %v1539
    %v1555 = vadd.f32 %v1502, %v1543
    %v1556 = vadd.f32 %v1503, %v1531
    %v1557 = vadd.f32 %v1504, %v1535
    %v1558 = vadd.f32 %v1505, %v1539
    %v1559 = vadd.f32 %v1506, %v1543
    %v1560 = vadd.f32 %v1507, %v1531
    %v1561 = vadd.f32 %v1508, %v1535
    %v1562 = vadd.f32 %v1509, %v1539
    %v1563 = vadd.f32 %v1510, %v1543
    %v1564 = vadd.f32 %v1511, %v1531
    %v1565 = vadd.f32 %v1512, %v1535
    %v1566 = vadd.f32 %v1513, %v1539
    %v1567 = vadd.f32 %v1514, %v1543
    %v1568 = vadd.f32 %v1515, %v1531
    %v1569 = vadd.f32 %v1516, %v1535
    %v1570 = vadd.f32 %v1517, %v1539
    %v1571 = vadd.f32 %v1518, %v1543
    %v1572 = vadd.f32 %v1519, %v1531
    %v1573 = vadd.f32 %v1520, %v1535
    %v1574 = vadd.f32 %v1521, %v1539
    %v1575 = vadd.f32 %v1522, %v1543
    %v1576 = vadd.f32 %v1523, %v1531
    %v1577 = vadd.f32 %v1524, %v1535
    %v1578 = vadd.f32 %v1525, %v1539
    %v1579 = vadd.f32 %v1526, %v1543
    %v1580 = vmax.f32 %v1548, 0.0
    %v1581 = vmax.f32 %v1549, 0.0
    %v1582 = vmax.f32 %v1550, 0.0
    %v1583 = vmax.f32 %v1551, 0.0
    %v1584 = vmax.f32 %v1552, 0.0
    %v1585 = vmax.f32 %v1553, 0.0
    %v1586 = vmax.f32 %v1554, 0.0
    %v1587 = vmax.f32 %v1555, 0.0
    %v1588 = vmax.f32 %v1556, 0.0
    %v1589 = vmax.f32 %v1557, 0.0
    %v1590 = vmax.f32 %v1558, 0.0
    %v1591 = vmax.f32 %v1559, 0.0
    %v1592 = vmax.f32 %v1560, 0.0
    %v1593 = vmax.f32 %v1561, 0.0
    %v1594 = vmax.f32 %v1562, 0.0
    %v1595 = vmax.f32 %v1563, 0.0
    %v1596 = vmax.f32 %v1564, 0.0
    %v1597 = vmax.f32 %v1565, 0.0
    %v1598 = vmax.f32 %v1566, 0.0
    %v1599 = vmax.f32 %v1567, 0.0
    %v1600 = vmax.f32 %v1568, 0.0
    %v1601 = vmax.f32 %v1569, 0.0
    %v1602 = vmax.f32 %v1570, 0.0
    %v1603 = vmax.f32 %v1571, 0.0
    %v1604 = vmax.f32 %v1572, 0.0
    %v1605 = vmax.f32 %v1573, 0.0
    %v1606 = vmax.f32 %v1574, 0.0
    %v1607 = vmax.f32 %v1575, 0.0
    %v1608 = vmax.f32 %v1576, 0.0
    %v1609 = vmax.f32 %v1577, 0.0
    %v1610 = vmax.f32 %v1578, 0.0
    %v1611 = vmax.f32 %v1579, 0.0
    %s1612 = smul.u32 4, 64
    %s1613 = smul.u32 %s1612, 2
    %s1614 = sshll.u32 %s1613, 4
    %1615 = dma.done [#allocation3], %s1614
    %v1616 = vpack.c.bf16 %v1584, %v1580
    %v1617 = vpack.c.bf16 %v1585, %v1581
    %v1618 = vpack.c.bf16 %v1586, %v1582
    %v1619 = vpack.c.bf16 %v1587, %v1583
    %v1620 = vpack.c.bf16 %v1592, %v1588
    %v1621 = vpack.c.bf16 %v1593, %v1589
    %v1622 = vpack.c.bf16 %v1594, %v1590
    %v1623 = vpack.c.bf16 %v1595, %v1591
    %v1624 = vpack.c.bf16 %v1600, %v1596
    %v1625 = vpack.c.bf16 %v1601, %v1597
    %v1626 = vpack.c.bf16 %v1602, %v1598
    %v1627 = vpack.c.bf16 %v1603, %v1599
    %v1628 = vpack.c.bf16 %v1608, %v1604
    %v1629 = vpack.c.bf16 %v1609, %v1605
    %v1630 = vpack.c.bf16 %v1610, %v1606
    %v1631 = vpack.c.bf16 %v1611, %v1607
    %v1632 = vld [vmem:[#allocation2] sm:$0xff]
    %v1633 = vld [vmem:[#allocation2 + $0x8] sm:$0xff]
    %v1634 = vld [vmem:[#allocation2 + $0x10] sm:$0xff]
    %v1635 = vld [vmem:[#allocation2 + $0x18] sm:$0xff]
    %v1636 = vld [vmem:[#allocation2 + $0x20] sm:$0xff]
    %v1637 = vld [vmem:[#allocation2 + $0x28] sm:$0xff]
    %v1638 = vld [vmem:[#allocation2 + $0x30] sm:$0xff]
    %v1639 = vld [vmem:[#allocation2 + $0x38] sm:$0xff]
    %v1640 = vld [vmem:[#allocation2 + $0x40] sm:$0xff]
    %v1641 = vld [vmem:[#allocation2 + $0x48] sm:$0xff]
    %v1642 = vld [vmem:[#allocation2 + $0x50] sm:$0xff]
    %v1643 = vld [vmem:[#allocation2 + $0x58] sm:$0xff]
    %v1644 = vld [vmem:[#allocation2 + $0x60] sm:$0xff]
    %v1645 = vld [vmem:[#allocation2 + $0x68] sm:$0xff]
    %v1646 = vld [vmem:[#allocation2 + $0x70] sm:$0xff]
    %v1647 = vld [vmem:[#allocation2 + $0x78] sm:$0xff]
    %v1648 = vld [vmem:[#allocation2 + $0x80] sm:$0xff]
    %v1649 = vld [vmem:[#allocation2 + $0x88] sm:$0xff]
    %v1650 = vld [vmem:[#allocation2 + $0x90] sm:$0xff]
    %v1651 = vld [vmem:[#allocation2 + $0x98] sm:$0xff]
    %v1652 = vld [vmem:[#allocation2 + $0xa0] sm:$0xff]
    %v1653 = vld [vmem:[#allocation2 + $0xa8] sm:$0xff]
    %v1654 = vld [vmem:[#allocation2 + $0xb0] sm:$0xff]
    %v1655 = vld [vmem:[#allocation2 + $0xb8] sm:$0xff]
    %v1656 = vld [vmem:[#allocation2 + $0xc0] sm:$0xff]
    %v1657 = vld [vmem:[#allocation2 + $0xc8] sm:$0xff]
    %v1658 = vld [vmem:[#allocation2 + $0xd0] sm:$0xff]
    %v1659 = vld [vmem:[#allocation2 + $0xd8] sm:$0xff]
    %v1660 = vld [vmem:[#allocation2 + $0xe0] sm:$0xff]
    %v1661 = vld [vmem:[#allocation2 + $0xe8] sm:$0xff]
    %v1662 = vld [vmem:[#allocation2 + $0xf0] sm:$0xff]
    %v1663 = vld [vmem:[#allocation2 + $0xf8] sm:$0xff]
    %v1664 = vld [vmem:[#allocation2 + $0x100] sm:$0xff]
    %v1665 = vld [vmem:[#allocation2 + $0x108] sm:$0xff]
    %v1666 = vld [vmem:[#allocation2 + $0x110] sm:$0xff]
    %v1667 = vld [vmem:[#allocation2 + $0x118] sm:$0xff]
    %v1668 = vld [vmem:[#allocation2 + $0x120] sm:$0xff]
    %v1669 = vld [vmem:[#allocation2 + $0x128] sm:$0xff]
    %v1670 = vld [vmem:[#allocation2 + $0x130] sm:$0xff]
    %v1671 = vld [vmem:[#allocation2 + $0x138] sm:$0xff]
    %v1672 = vld [vmem:[#allocation2 + $0x140] sm:$0xff]
    %v1673 = vld [vmem:[#allocation2 + $0x148] sm:$0xff]
    %v1674 = vld [vmem:[#allocation2 + $0x150] sm:$0xff]
    %v1675 = vld [vmem:[#allocation2 + $0x158] sm:$0xff]
    %v1676 = vld [vmem:[#allocation2 + $0x160] sm:$0xff]
    %v1677 = vld [vmem:[#allocation2 + $0x168] sm:$0xff]
    %v1678 = vld [vmem:[#allocation2 + $0x170] sm:$0xff]
    %v1679 = vld [vmem:[#allocation2 + $0x178] sm:$0xff]
    %v1680 = vld [vmem:[#allocation2 + $0x180] sm:$0xff]
    %v1681 = vld [vmem:[#allocation2 + $0x188] sm:$0xff]
    %v1682 = vld [vmem:[#allocation2 + $0x190] sm:$0xff]
    %v1683 = vld [vmem:[#allocation2 + $0x198] sm:$0xff]
    %v1684 = vld [vmem:[#allocation2 + $0x1a0] sm:$0xff]
    %v1685 = vld [vmem:[#allocation2 + $0x1a8] sm:$0xff]
    %v1686 = vld [vmem:[#allocation2 + $0x1b0] sm:$0xff]
    %v1687 = vld [vmem:[#allocation2 + $0x1b8] sm:$0xff]
    %v1688 = vld [vmem:[#allocation2 + $0x1c0] sm:$0xff]
    %v1689 = vld [vmem:[#allocation2 + $0x1c8] sm:$0xff]
    %v1690 = vld [vmem:[#allocation2 + $0x1d0] sm:$0xff]
    %v1691 = vld [vmem:[#allocation2 + $0x1d8] sm:$0xff]
    %v1692 = vld [vmem:[#allocation2 + $0x1e0] sm:$0xff]
    %v1693 = vld [vmem:[#allocation2 + $0x1e8] sm:$0xff]
    %v1694 = vld [vmem:[#allocation2 + $0x1f0] sm:$0xff]
    %v1695 = vld [vmem:[#allocation2 + $0x1f8] sm:$0xff]
    %1696 = vmatprep.subr.bf16.mxu0 %v1633
    %1697 = vmatpush1.bf16.msra.mxu0 %v1632
    %1698 = vmatprep.subr.bf16.mxu0 %v1635
    %1699 = vmatpush1.bf16.msra.mxu0 %v1634
    %1700 = vmatprep.subr.bf16.mxu0 %v1637
    %1701 = vmatpush1.bf16.msra.mxu0 %v1636
    %1702 = vmatprep.subr.bf16.mxu0 %v1639
    %1703 = vmatpush1.bf16.msra.mxu0 %v1638
    %1704 = vmatprep.subr.bf16.mxu0 %v1641
    %1705 = vmatpush1.bf16.msra.mxu0 %v1640
    %1706 = vmatprep.subr.bf16.mxu0 %v1643
    %1707 = vmatpush1.bf16.msra.mxu0 %v1642
    %1708 = vmatprep.subr.bf16.mxu0 %v1645
    %1709 = vmatpush1.bf16.msra.mxu0 %v1644
    %1710 = vmatprep.subr.bf16.mxu0 %v1647
    %1711 = vmatpush1.bf16.msra.mxu0 %v1646
    %1712 = vmatprep.subr.bf16.mxu0 %v1649
    %1713 = vmatpush1.bf16.msra.mxu0 %v1648
    %1714 = vmatprep.subr.bf16.mxu0 %v1651
    %1715 = vmatpush1.bf16.msra.mxu0 %v1650
    %1716 = vmatprep.subr.bf16.mxu0 %v1653
    %1717 = vmatpush1.bf16.msra.mxu0 %v1652
    %1718 = vmatprep.subr.bf16.mxu0 %v1655
    %1719 = vmatpush1.bf16.msra.mxu0 %v1654
    %1720 = vmatprep.subr.bf16.mxu0 %v1657
    %1721 = vmatpush1.bf16.msra.mxu0 %v1656
    %1722 = vmatprep.subr.bf16.mxu0 %v1659
    %1723 = vmatpush1.bf16.msra.mxu0 %v1658
    %1724 = vmatprep.subr.bf16.mxu0 %v1661
    %1725 = vmatpush1.bf16.msra.mxu0 %v1660
    %1726 = vmatprep.subr.bf16.mxu0 %v1663
    %1727 = vmatpush1.bf16.msra.mxu0 %v1662
    %1728 = vmatprep.mubr.bf16.mxu0 %v1617
    %1729 = vmatmul.mubr.bf16.gmra.mrb[0].mxu0 %v1616
    %v1730 = vpop.f32.mrb[0].mxu0
    %v1731 = vadd.f32 0.0, %v1730
    %v1732 = vpop.f32.mrb[0].mxu0
    %v1733 = vadd.f32 0.0, %v1732
    %v1734 = vpop.f32.mrb[0].mxu0
    %v1735 = vadd.f32 0.0, %v1734
    %v1736 = vpop.f32.mrb[0].mxu0
    %v1737 = vadd.f32 0.0, %v1736
    %1738 = vmatprep.mubr.bf16.mxu0 %v1621
    %1739 = vmatmul.mubr.bf16.gmra.mrb[0].mxu0 %v1620
    %v1740 = vpop.f32.mrb[0].mxu0
    %v1741 = vadd.f32 0.0, %v1740
    %v1742 = vpop.f32.mrb[0].mxu0
    %v1743 = vadd.f32 0.0, %v1742
    %v1744 = vpop.f32.mrb[0].mxu0
    %v1745 = vadd.f32 0.0, %v1744
    %v1746 = vpop.f32.mrb[0].mxu0
    %v1747 = vadd.f32 0.0, %v1746
    %1748 = vmatprep.mubr.bf16.mxu0 %v1625
    %1749 = vmatmul.mubr.bf16.gmra.mrb[0].mxu0 %v1624
    %v1750 = vpop.f32.mrb[0].mxu0
    %v1751 = vadd.f32 0.0, %v1750
    %v1752 = vpop.f32.mrb[0].mxu0
    %v1753 = vadd.f32 0.0, %v1752
    %v1754 = vpop.f32.mrb[0].mxu0
    %v1755 = vadd.f32 0.0, %v1754
    %v1756 = vpop.f32.mrb[0].mxu0
    %v1757 = vadd.f32 0.0, %v1756
    %1758 = vmatprep.mubr.bf16.mxu0 %v1629
    %1759 = vmatmul.mubr.bf16.gmra.mrb[0].mxu0 %v1628
    %v1760 = vpop.f32.mrb[0].mxu0
    %v1761 = vadd.f32 0.0, %v1760
    %v1762 = vpop.f32.mrb[0].mxu0
    %v1763 = vadd.f32 0.0, %v1762
    %v1764 = vpop.f32.mrb[0].mxu0
    %v1765 = vadd.f32 0.0, %v1764
    %v1766 = vpop.f32.mrb[0].mxu0
    %v1767 = vadd.f32 0.0, %v1766
    %1768 = vdwg.mxu0
    %1769 = vmatprep.subr.bf16.mxu0 %v1665
    %1770 = vmatpush1.bf16.msra.mxu0 %v1664
    %1771 = vmatprep.subr.bf16.mxu0 %v1667
    %1772 = vmatpush1.bf16.msra.mxu0 %v1666
    %1773 = vmatprep.subr.bf16.mxu0 %v1669
    %1774 = vmatpush1.bf16.msra.mxu0 %v1668
    %1775 = vmatprep.subr.bf16.mxu0 %v1671
    %1776 = vmatpush1.bf16.msra.mxu0 %v1670
    %1777 = vmatprep.subr.bf16.mxu0 %v1673
    %1778 = vmatpush1.bf16.msra.mxu0 %v1672
    %1779 = vmatprep.subr.bf16.mxu0 %v1675
    %1780 = vmatpush1.bf16.msra.mxu0 %v1674
    %1781 = vmatprep.subr.bf16.mxu0 %v1677
    %1782 = vmatpush1.bf16.msra.mxu0 %v1676
    %1783 = vmatprep.subr.bf16.mxu0 %v1679
    %1784 = vmatpush1.bf16.msra.mxu0 %v1678
    %1785 = vmatprep.subr.bf16.mxu0 %v1681
    %1786 = vmatpush1.bf16.msra.mxu0 %v1680
    %1787 = vmatprep.subr.bf16.mxu0 %v1683
    %1788 = vmatpush1.bf16.msra.mxu0 %v1682
    %1789 = vmatprep.subr.bf16.mxu0 %v1685
    %1790 = vmatpush1.bf16.msra.mxu0 %v1684
    %1791 = vmatprep.subr.bf16.mxu0 %v1687
    %1792 = vmatpush1.bf16.msra.mxu0 %v1686
    %1793 = vmatprep.subr.bf16.mxu0 %v1689
    %1794 = vmatpush1.bf16.msra.mxu0 %v1688
    %1795 = vmatprep.subr.bf16.mxu0 %v1691
    %1796 = vmatpush1.bf16.msra.mxu0 %v1690
    %1797 = vmatprep.subr.bf16.mxu0 %v1693
    %1798 = vmatpush1.bf16.msra.mxu0 %v1692
    %1799 = vmatprep.subr.bf16.mxu0 %v1695
    %1800 = vmatpush1.bf16.msra.mxu0 %v1694
    %1801 = vmatprep.mubr.bf16.mxu0 %v1619
    %1802 = vmatmul.mubr.bf16.gmra.mrb[0].mxu0 %v1618
    %v1803 = vpop.f32.mrb[0].mxu0
    %v1804 = vadd.f32 %v1731, %v1803
    %v1805 = vpop.f32.mrb[0].mxu0
    %v1806 = vadd.f32 %v1733, %v1805
    %v1807 = vpop.f32.mrb[0].mxu0
    %v1808 = vadd.f32 %v1735, %v1807
    %v1809 = vpop.f32.mrb[0].mxu0
    %v1810 = vadd.f32 %v1737, %v1809
    %1811 = vmatprep.mubr.bf16.mxu0 %v1623
    %1812 = vmatmul.mubr.bf16.gmra.mrb[0].mxu0 %v1622
    %v1813 = vpop.f32.mrb[0].mxu0
    %v1814 = vadd.f32 %v1741, %v1813
    %v1815 = vpop.f32.mrb[0].mxu0
    %v1816 = vadd.f32 %v1743, %v1815
    %v1817 = vpop.f32.mrb[0].mxu0
    %v1818 = vadd.f32 %v1745, %v1817
    %v1819 = vpop.f32.mrb[0].mxu0
    %v1820 = vadd.f32 %v1747, %v1819
    %1821 = vmatprep.mubr.bf16.mxu0 %v1627
    %1822 = vmatmul.mubr.bf16.gmra.mrb[0].mxu0 %v1626
    %v1823 = vpop.f32.mrb[0].mxu0
    %v1824 = vadd.f32 %v1751, %v1823
    %v1825 = vpop.f32.mrb[0].mxu0
    %v1826 = vadd.f32 %v1753, %v1825
    %v1827 = vpop.f32.mrb[0].mxu0
    %v1828 = vadd.f32 %v1755, %v1827
    %v1829 = vpop.f32.mrb[0].mxu0
    %v1830 = vadd.f32 %v1757, %v1829
    %1831 = vmatprep.mubr.bf16.mxu0 %v1631
    %1832 = vmatmul.mubr.bf16.gmra.mrb[0].mxu0 %v1630
    %v1833 = vpop.f32.mrb[0].mxu0
    %v1834 = vadd.f32 %v1761, %v1833
    %v1835 = vpop.f32.mrb[0].mxu0
    %v1836 = vadd.f32 %v1763, %v1835
    %v1837 = vpop.f32.mrb[0].mxu0
    %v1838 = vadd.f32 %v1765, %v1837
    %v1839 = vpop.f32.mrb[0].mxu0
    %v1840 = vadd.f32 %v1767, %v1839
    %1841 = vdwg.mxu0
    %v1842 = vadd.f32 %v1804, %v1808
    %v1843 = vadd.f32 %v1842, %v1814
    %v1844 = vadd.f32 %v1843, %v1818
    %v1845 = vadd.f32 %v1844, %v1824
    %v1846 = vadd.f32 %v1845, %v1828
    %v1847 = vadd.f32 %v1846, %v1834
    %v1848 = vadd.f32 %v1847, %v1838
    %v1849 = vrot.slane %v1848, 4
    %v1850 = vadd.f32 %v1848, %v1849
    %v1851 = vrot.slane %v1850, 2
    %v1852 = vadd.f32 %v1850, %v1851
    %v1853 = vrot.slane %v1852, 1
    %v1854 = vadd.f32 %v1852, %v1853
    %v1855 = vadd.f32 %v1806, %v1810
    %v1856 = vadd.f32 %v1855, %v1816
    %v1857 = vadd.f32 %v1856, %v1820
    %v1858 = vadd.f32 %v1857, %v1826
    %v1859 = vadd.f32 %v1858, %v1830
    %v1860 = vadd.f32 %v1859, %v1836
    %v1861 = vadd.f32 %v1860, %v1840
    %v1862 = vrot.slane %v1861, 4
    %v1863 = vadd.f32 %v1861, %v1862
    %v1864 = vrot.slane %v1863, 2
    %v1865 = vadd.f32 %v1863, %v1864
    %v1866 = vrot.slane %v1865, 1
    %v1867 = vadd.f32 %v1865, %v1866
    %v1868 = vmul.f32 %v1854, 0.015625
    %v1869 = vmul.f32 %v1867, 0.015625
    %v1870 = vmul.f32 %v1804, %v1804
    %v1871 = vmul.f32 %v1806, %v1806
    %v1872 = vmul.f32 %v1808, %v1808
    %v1873 = vmul.f32 %v1810, %v1810
    %v1874 = vmul.f32 %v1814, %v1814
    %v1875 = vmul.f32 %v1816, %v1816
    %v1876 = vmul.f32 %v1818, %v1818
    %v1877 = vmul.f32 %v1820, %v1820
    %v1878 = vmul.f32 %v1824, %v1824
    %v1879 = vmul.f32 %v1826, %v1826
    %v1880 = vmul.f32 %v1828, %v1828
    %v1881 = vmul.f32 %v1830, %v1830
    %v1882 = vmul.f32 %v1834, %v1834
    %v1883 = vmul.f32 %v1836, %v1836
    %v1884 = vmul.f32 %v1838, %v1838
    %v1885 = vmul.f32 %v1840, %v1840
    %v1886 = vadd.f32 %v1870, %v1872
    %v1887 = vadd.f32 %v1886, %v1874
    %v1888 = vadd.f32 %v1887, %v1876
    %v1889 = vadd.f32 %v1888, %v1878
    %v1890 = vadd.f32 %v1889, %v1880
    %v1891 = vadd.f32 %v1890, %v1882
    %v1892 = vadd.f32 %v1891, %v1884
    %v1893 = vrot.slane %v1892, 4
    %v1894 = vadd.f32 %v1892, %v1893
    %v1895 = vrot.slane %v1894, 2
    %v1896 = vadd.f32 %v1894, %v1895
    %v1897 = vrot.slane %v1896, 1
    %v1898 = vadd.f32 %v1896, %v1897
    %v1899 = vadd.f32 %v1871, %v1873
    %v1900 = vadd.f32 %v1899, %v1875
    %v1901 = vadd.f32 %v1900, %v1877
    %v1902 = vadd.f32 %v1901, %v1879
    %v1903 = vadd.f32 %v1902, %v1881
    %v1904 = vadd.f32 %v1903, %v1883
    %v1905 = vadd.f32 %v1904, %v1885
    %v1906 = vrot.slane %v1905, 4
    %v1907 = vadd.f32 %v1905, %v1906
    %v1908 = vrot.slane %v1907, 2
    %v1909 = vadd.f32 %v1907, %v1908
    %v1910 = vrot.slane %v1909, 1
    %v1911 = vadd.f32 %v1909, %v1910
    %v1912 = vmul.f32 %v1898, 0.015625
    %v1913 = vmul.f32 %v1911, 0.015625
    %v1914 = vmul.f32 %v1868, %v1868
    %v1915 = vmul.f32 %v1869, %v1869
    %v1916 = vsub.f32 %v1912, %v1914
    %v1917 = vsub.f32 %v1913, %v1915
    %v1918 = vmax.f32 %v1916, 0.0
    %v1919 = vmax.f32 %v1917, 0.0
    %v1920 = vld [vmem:[%s5] sm:$0x3]
    %v1921 = vadd.f32 %v1918, 1e-05
    %v1922 = vadd.f32 %v1919, 1e-05
    %v1923 = vrsqrt.pop %v1921
    %v1924 = vrsqrt.pop %v1922
    %v1927 = vcombine.low %v1923, %v1924
    %v1929 = vunpack.c.l.s4 1966171168
    %v1930 = vunpack.c.0.s8 %v1929
    %v1931 = vlaneseq
    %v1932 = vshrl.u32 %v1931, 7
    %v1933 = vsub.s32 %v1930, %v1932
    %v1934 = vrot.slane %v1927, %v1933
    %v1936 = vunpack.c.l.s4 1966171168
    %v1937 = vunpack.c.0.s8 %v1936
    %v1938 = vlaneseq
    %v1939 = vshrl.u32 %v1938, 7
    %v1940 = vsub.s32 %v1937, %v1939
    %v1941 = vrot.slane %v1934, %v1940
    %v1943 = vmul.f32 %v1920, %v1941
    %v1944 = vld [vmem:[%s6] sm:$0x3]
    %v1946 = vlaneseq
    %v1947 = vshrl.u32 %v1946, 7
    %v1948 = vsub.s32 0, %v1947
    %v1949 = vrot.slane %v1943, %v1948
    %v1950 = vlaneseq
    %v1951 = vshrl.u32 %v1950, 7
    %v1952 = vsub.s32 1, %v1951
    %v1953 = vrot.slane %v1943, %v1952
    %v1956 = vmul.f32 %v1868, %v1949
    %v1957 = vmul.f32 %v1869, %v1953
    %v1960 = vcombine.low %v1956, %v1957
    %v1962 = vunpack.c.l.s4 1966171168
    %v1963 = vunpack.c.0.s8 %v1962
    %v1964 = vlaneseq
    %v1965 = vshrl.u32 %v1964, 7
    %v1966 = vsub.s32 %v1963, %v1965
    %v1967 = vrot.slane %v1960, %v1966
    %v1969 = vunpack.c.l.s4 1966171168
    %v1970 = vunpack.c.0.s8 %v1969
    %v1971 = vlaneseq
    %v1972 = vshrl.u32 %v1971, 7
    %v1973 = vsub.s32 %v1970, %v1972
    %v1974 = vrot.slane %v1967, %v1973
    %v1976 = vsub.f32 %v1944, %v1974
    %v1977 = vmul.f32 %v1804, %v1949
    %v1978 = vmul.f32 %v1806, %v1953
    %v1979 = vmul.f32 %v1808, %v1949
    %v1980 = vmul.f32 %v1810, %v1953
    %v1981 = vmul.f32 %v1814, %v1949
    %v1982 = vmul.f32 %v1816, %v1953
    %v1983 = vmul.f32 %v1818, %v1949
    %v1984 = vmul.f32 %v1820, %v1953
    %v1985 = vmul.f32 %v1824, %v1949
    %v1986 = vmul.f32 %v1826, %v1953
    %v1987 = vmul.f32 %v1828, %v1949
    %v1988 = vmul.f32 %v1830, %v1953
    %v1989 = vmul.f32 %v1834, %v1949
    %v1990 = vmul.f32 %v1836, %v1953
    %v1991 = vmul.f32 %v1838, %v1949
    %v1992 = vmul.f32 %v1840, %v1953
    %v1994 = vlaneseq
    %v1995 = vshrl.u32 %v1994, 7
    %v1996 = vsub.s32 0, %v1995
    %v1997 = vrot.slane %v1976, %v1996
    %v1998 = vlaneseq
    %v1999 = vshrl.u32 %v1998, 7
    %v2000 = vsub.s32 1, %v1999
    %v2001 = vrot.slane %v1976, %v2000
    %v2004 = vadd.f32 %v1977, %v1997
    %v2005 = vadd.f32 %v1978, %v2001
    %v2006 = vadd.f32 %v1979, %v1997
    %v2007 = vadd.f32 %v1980, %v2001
    %v2008 = vadd.f32 %v1981, %v1997
    %v2009 = vadd.f32 %v1982, %v2001
    %v2010 = vadd.f32 %v1983, %v1997
    %v2011 = vadd.f32 %v1984, %v2001
    %v2012 = vadd.f32 %v1985, %v1997
    %v2013 = vadd.f32 %v1986, %v2001
    %v2014 = vadd.f32 %v1987, %v1997
    %v2015 = vadd.f32 %v1988, %v2001
    %v2016 = vadd.f32 %v1989, %v1997
    %v2017 = vadd.f32 %v1990, %v2001
    %v2018 = vadd.f32 %v1991, %v1997
    %v2019 = vadd.f32 %v1992, %v2001
    %2020 = vst [vmem:[#allocation9] sm:$0xff] %v2004
    %2021 = vst [vmem:[#allocation9 + $0x8] sm:$0xff] %v2005
    %2022 = vst [vmem:[#allocation9 + $0x10] sm:$0xff] %v2006
    %2023 = vst [vmem:[#allocation9 + $0x18] sm:$0xff] %v2007
    %2024 = vst [vmem:[#allocation9 + $0x20] sm:$0xff] %v2008
    %2025 = vst [vmem:[#allocation9 + $0x28] sm:$0xff] %v2009
    %2026 = vst [vmem:[#allocation9 + $0x30] sm:$0xff] %v2010
    %2027 = vst [vmem:[#allocation9 + $0x38] sm:$0xff] %v2011
    %2028 = vst [vmem:[#allocation9 + $0x40] sm:$0xff] %v2012
    %2029 = vst [vmem:[#allocation9 + $0x48] sm:$0xff] %v2013
    %2030 = vst [vmem:[#allocation9 + $0x50] sm:$0xff] %v2014
    %2031 = vst [vmem:[#allocation9 + $0x58] sm:$0xff] %v2015
    %2032 = vst [vmem:[#allocation9 + $0x60] sm:$0xff] %v2016
    %2033 = vst [vmem:[#allocation9 + $0x68] sm:$0xff] %v2017
    %2034 = vst [vmem:[#allocation9 + $0x70] sm:$0xff] %v2018
    %2035 = vst [vmem:[#allocation9 + $0x78] sm:$0xff] %v2019
    // Predicated region
    $region34: #{tpu_custom_call.1} parent=1 // pred_check
      _
    $region35: #{tpu_custom_call.1} parent=1 // pred_check_branch
      %2037 = sbr.rel (0) target = $region37
    $region36: #{tpu_custom_call.1} parent=1 // pred_region
      %s2039 = ssub.s32 2048, 2048
      %2040 = vsyncadd [#allocation6], %s2039
      %s2041 = sshll.u32 [#allocation9], 4
      %s2042 = int_to_ptr.vmem [resolvable:$true] %s2041
      %2047 = dma.vmem_to_hbm [thread:$0]  %s2042, 2048, %s7, [#allocation6], 256, 256, 16
    $region37: #{tpu_custom_call.1} parent=1 // pred_fallthru
      _
    // Predicated region
    $region38: #{tpu_custom_call.1} parent=1 // pred_check
      _
    $region39: #{tpu_custom_call.1} parent=1 // pred_check_branch
      %2049 = sbr.rel (0) target = $region41
    $region40: #{tpu_custom_call.1} parent=1 // pred_region
      %2050 = dma.done [#allocation6], 2048
    $region41: #{tpu_custom_call.1} parent=1 // pred_fallthru
      _
    %2051 = vsyncpa [#allocation5], 1
    %2052 = vsyncpa [#allocation8], 1
    %2053 = vsyncpa [#allocation6], 1
  %2054 = vsyncmov [#allocation3]
  %s2055 = vpop.sfrf %2054
  %p2056 = scmp.eq.s32.totalorder %s2055, 0
  %p2057 = pneg %p2056
  %2059 = shalt.err (%p2057)

</llo_original>
